<compile_context>
chip_gen: v7x
topology: tpu7x:2x2x1
jax: 0.10.0
libtpu: 0.0.40
codegen_flags: <defaults>
</compile_context>

<pallas_src>
import functools

import numpy as np

import jax
import jax.numpy as jnp
from jax import lax
from jax.experimental import pallas as pl
from jax.experimental.pallas import tpu as pltpu


def _vblock_kernel(xcat_ref, xsel_ref, vm1_ref, vm2_ref, b1_ref, b2_ref,
                   b4_ref, b4r_ref, aff_ref, aff3_ref, pc_ref, pco_ref,
                   srow_ref, out_ref, y1s_ref, *, R, cnt, cnt_o):
    f32, bf16 = jnp.float32, jnp.bfloat16
    eps = 1e-5
    slope = 0.01                        # nn.LeakyReLU default negative_slope
    Rc = R - 2                          # rows carried past conv2

    def leaky(x):
        return jnp.where(x >= 0, x, slope * x)

    def batch_norm(x, g_row, b_row, proj_ref, count, mask=None):
        # Single-pass BN (training semantics, biased variance, eps=1e-5).
        # `proj` sums the interleaved (w, c) lanes per channel and broadcasts
        # back across w in one matmul.  Kept in f32 on purpose: per-channel
        # means reach ~3x the std, so bf16 sums would lose variance to the
        # E[x^2] - E[x]^2 cancellation.
        xm = x if mask is None else x * mask
        s1 = jnp.sum(xm, axis=0, keepdims=True)
        s2 = jnp.sum(xm * xm, axis=0, keepdims=True)
        proj = proj_ref[...]
        mean = jnp.dot(s1, proj, preferred_element_type=f32) * (1.0 / count)
        ex2 = jnp.dot(s2, proj, preferred_element_type=f32) * (1.0 / count)
        inv = lax.rsqrt(ex2 - mean * mean + eps)
        return (x - mean) * (inv * g_row) + b_row

    b1_row, b2_row = aff_ref[0:1, :], aff_ref[1:2, :]
    g1_row, be1_row = aff_ref[2:3, :], aff_ref[3:4, :]
    g2_row, be2_row = aff_ref[4:5, :], aff_ref[5:6, :]
    vm1 = vm1_ref[...]                  # (R, 1)   1.0 at real pixels, 0.0 at pads
    vm2 = vm2_ref[...]                  # (R-2, 1) same mask, shifted for conv2

    # conv1 + BN1 + LeakyReLU.  The wrapper supplies the three vertically
    # shifted taps lane-concatenated, so this is one K = 3*W*Cin bf16 matmul.
    c1 = jnp.dot(xcat_ref[...], b1_ref[...], preferred_element_type=f32) + b1_row
    y1 = leaky(batch_norm(c1, g1_row, be1_row, pc_ref, cnt, mask=vm1)) * vm1

    # Stage y1 once, aligned at sublane offset 0 (pad rows are already zero via
    # the mask -> no zero-row staging, no misaligned store).
    y1s_ref[...] = y1

    # conv2 + LeakyReLU + BN2: three +0/+1/+2 row-shifted reads of y1,
    # lane-concatenated and fed to one K = 3*W*Cout bf16 matmul.
    c2in = jnp.concatenate(
        [y1s_ref[0:Rc, :], y1s_ref[1:Rc + 1, :], y1s_ref[2:R, :]],
        axis=1).astype(bf16)
    c2 = leaky(jnp.dot(c2in, b2_ref[...], preferred_element_type=f32) + b2_row)
    y2 = batch_norm(c2, g2_row, be2_row, pc_ref, cnt, mask=vm2)

    # Row compaction (vertical stride) -> conv4 (1x1, horizontal stride folded
    # into B4) + residual (identity or 1x1 conv3, folded into B4r and applied
    # to the pre-selected input rows) -> BN3 -> Softplus.  Only the
    # stride-surviving pixels are touched.
    t = jnp.dot(srow_ref[...], y2.astype(bf16), preferred_element_type=f32)
    z = (jnp.dot(t.astype(bf16), b4_ref[...], preferred_element_type=f32)
         + jnp.dot(xsel_ref[...], b4r_ref[...], preferred_element_type=f32)
         + aff3_ref[0:1, :])
    z = batch_norm(z, aff3_ref[1:2, :], aff3_ref[2:3, :], pco_ref, cnt_o)

    # Softplus (beta=1, threshold=20).  Pad lanes hold softplus(0); the wrapper
    # slices them off.
    out_ref[...] = jnp.where(z > 20.0, z, jnp.log(1.0 + jnp.exp(z)))


def make_vblock_forward(params, x_shape, *, use_1x1conv=False, strides=1,
                        down_stride=2):
    """Builds all constants once (host-side) and returns a jitted forward fn."""
    assert strides == 1, "only strides=1 (the module default) is implemented"
    N, Cin, H, W = x_shape
    Cout = int(params["w1"].shape[0])
    ds = down_stride
    Hp = H + 2                              # per-image padded-row period
    R = N * Hp                              # working (padded) row count
    Rc = R - 2
    out_h = (H - 1) // ds + 1
    out_w = (W - 1) // ds + 1
    NOH = N * out_h
    WCi, WCo, OWC = W * Cin, W * Cout, out_w * Cout
    OWCP = max(128, ((OWC + 127) // 128) * 128)   # lane-dense output width
    cnt = float(N * H * W)                  # BN1/BN2 pixel count per channel
    cnt_o = float(N * out_h * out_w)        # BN3 pixel count per channel
    f32, bf16 = jnp.float32, jnp.bfloat16

    p = {k: np.asarray(v, np.float32) for k, v in params.items()}

    # ---- banded conv weights: horizontal taps + horizontal "same" padding
    #      folded into the band sparsity; the 3 vertical taps stacked along K.
    def banded3x3(K):                        # (Co, Ci, 3, 3) torch OIHW
        Co, Ci = K.shape[0], K.shape[1]
        KT = np.transpose(K, (2, 3, 1, 0))   # (3, 3, Ci, Co)
        mats = []
        for di in range(3):
            B = np.zeros((W * Ci, W * Co), np.float32)
            for dj in range(3):
                B += np.kron(np.eye(W, k=-(dj - 1), dtype=np.float32),
                             KT[di, dj])
            mats.append(B)
        return np.concatenate(mats, axis=0)  # (3*W*Ci, W*Co)

    def pad_cols(M):
        out = np.zeros((M.shape[0], OWCP), np.float32)
        out[:, :OWC] = M
        return out

    B1 = banded3x3(p["w1"])                  # (3*W*Cin, W*Cout)
    B2 = banded3x3(p["w2"])                  # (3*W*Cout, W*Cout)

    # conv4 (1x1, stride ds): column stride folded in; residual branch folded
    # into B4r so it is only evaluated at surviving pixels.
    S4 = np.eye(W, dtype=np.float32)[:, ::ds]            # (W, out_w)
    w4 = p["w4"][:, :, 0, 0]                              # (Cout, Cout)
    B4 = pad_cols(np.kron(S4, w4.T))                      # (W*Cout, OWCP)
    if use_1x1conv:
        w3 = p["w3"][:, :, 0, 0]                          # (Cout, Cin)
        B4r = pad_cols(np.kron(S4, (w4 @ w3).T))          # (W*Cin, OWCP)
        b4_eff = p["b4"] + w4 @ p["b3"]
    else:
        assert Cin == Cout, "identity residual requires Cin == Cout"
        B4r = B4
        b4_eff = p["b4"]

    tile_w = lambda v: np.tile(v, W).reshape(1, WCo)
    tile_o = lambda v: pad_cols(np.tile(v, out_w).reshape(1, OWC))
    aff = np.concatenate([tile_w(p["b1"]), tile_w(p["b2"]),
                          tile_w(p["g1"]), tile_w(p["be1"]),
                          tile_w(p["g2"]), tile_w(p["be2"])], axis=0)
    aff3 = np.concatenate([tile_o(b4_eff), tile_o(p["g3"]),
                           tile_o(p["be3"])], axis=0)

    # Per-channel sum + broadcast projectors over interleaved (w, c) lanes.
    Pc = np.kron(np.ones((W, W), np.float32), np.eye(Cout, dtype=np.float32))
    Pco = np.zeros((OWCP, OWCP), np.float32)
    Pco[:OWC, :OWC] = np.kron(np.ones((out_w, out_w), np.float32),
                              np.eye(Cout, dtype=np.float32))

    # Valid-row mask (padded-row indexing) and stride-row 0/1 selector.
    q = np.arange(R) % Hp
    vm1 = ((q >= 1) & (q <= H)).astype(np.float32).reshape(R, 1)
    vm2 = vm1[1:R - 1].copy()                             # conv2 row space
    sel = np.array([n * Hp + j * ds for n in range(N) for j in range(out_h)])
    Srow = np.zeros((NOH, Rc), np.float32)
    Srow[np.arange(NOH), sel] = 1.0

    # Device-resident constants (built once).  Matmul operands in bf16 (0/1
    # matrices are exact); BN projectors and affine rows stay f32.
    cB1 = jnp.asarray(B1, bf16)
    cB2 = jnp.asarray(B2, bf16)
    cB4 = jnp.asarray(B4, bf16)
    cB4r = jnp.asarray(B4r, bf16)
    cSrow = jnp.asarray(Srow, bf16)
    cPc = jnp.asarray(Pc, f32)
    cPco = jnp.asarray(Pco, f32)
    caff = jnp.asarray(aff, f32)
    caff3 = jnp.asarray(aff3, f32)
    cvm1 = jnp.asarray(vm1, f32)
    cvm2 = jnp.asarray(vm2, f32)

    kernel = functools.partial(_vblock_kernel, R=R, cnt=cnt, cnt_o=cnt_o)
    call = pl.pallas_call(
        kernel,
        out_shape=jax.ShapeDtypeStruct((NOH, OWCP), f32),
        scratch_shapes=[pltpu.VMEM((R, WCo), f32)],       # aligned y1 stage
    )

    @jax.jit
    def forward(x_nchw):
        # NCHW -> lane-dense (rows, W*C) with channels fastest, plus the three
        # vertically shifted conv1 taps lane-concatenated (vertical "same"
        # padding folded into this construction).
        x_nhwc = jnp.transpose(x_nchw, (0, 2, 3, 1))              # (N,H,W,Ci)
        xp = jnp.pad(x_nhwc, ((0, 0), (2, 2), (0, 0), (0, 0)))
        taps = jnp.stack([xp[:, d:d + Hp] for d in range(3)], axis=2)
        x_cat = taps.reshape(R, 3 * WCi).astype(bf16)             # (R, 3*WCi)
        # Residual rows at the surviving vertical-stride positions only.
        x_sel = x_nhwc[:, ::ds, :, :].reshape(NOH, WCi).astype(bf16)

        out2d = call(x_cat, x_sel, cvm1, cvm2, cB1, cB2, cB4, cB4r,
                     caff, caff3, cPc, cPco, cSrow)
        out = out2d[:, :OWC].reshape(N, out_h, out_w, Cout)
        return jnp.transpose(out, (0, 3, 1, 2))                   # NCHW

    return forward


# ---------------------------- pure-JAX reference ---------------------------
def vblock_reference(x, p, use_1x1conv, strides, down_stride):
    def conv(x, w, b, stride, pad):
        y = lax.conv_general_dilated(x, w, (stride, stride),
                                     [(pad, pad), (pad, pad)],
                                     dimension_numbers=("NCHW", "OIHW", "NCHW"))
        return y + b[None, :, None, None]

    def bn(x, g, be, eps=1e-5):
        m = jnp.mean(x, axis=(0, 2, 3), keepdims=True)
        v = jnp.mean((x - m) ** 2, axis=(0, 2, 3), keepdims=True)
        return (x - m) / jnp.sqrt(v + eps) * g[None, :, None, None] \
            + be[None, :, None, None]

    leaky = lambda t: jnp.where(t >= 0, t, 0.01 * t)
    y = leaky(bn(conv(x, p["w1"], p["b1"], strides, 1), p["g1"], p["be1"]))
    y = bn(leaky(conv(y, p["w2"], p["b2"], strides, 1)), p["g2"], p["be2"])
    xr = conv(x, p["w3"], p["b3"], strides, 0) if use_1x1conv else x
    y = y + xr
    z = bn(conv(y, p["w4"], p["b4"], down_stride, 0), p["g3"], p["be3"])
    return jnp.where(z > 20.0, z, jnp.log1p(jnp.exp(z)))


def init_params(key, cin, cout):
    ks = jax.random.split(key, 14)
    p = {
        "w1": 0.1 * jax.random.normal(ks[0], (cout, cin, 3, 3), jnp.float32),
        "b1": 0.1 * jax.random.normal(ks[1], (cout,), jnp.float32),
        "w2": 0.1 * jax.random.normal(ks[2], (cout, cout, 3, 3), jnp.float32),
        "b2": 0.1 * jax.random.normal(ks[3], (cout,), jnp.float32),
        "w3": 0.1 * jax.random.normal(ks[4], (cout, cin, 1, 1), jnp.float32),
        "b3": 0.1 * jax.random.normal(ks[5], (cout,), jnp.float32),
        "w4": 0.1 * jax.random.normal(ks[6], (cout, cout, 1, 1), jnp.float32),
        "b4": 0.1 * jax.random.normal(ks[7], (cout,), jnp.float32),
    }
    for i, n in enumerate(("1", "2", "3")):
        p["g" + n] = 1.0 + 0.1 * jax.random.normal(ks[8 + i], (cout,),
                                                   jnp.float32)
        p["be" + n] = 0.1 * jax.random.normal(ks[11 + i], (cout,), jnp.float32)
    return p


if __name__ == "__main__":
    key = jax.random.PRNGKey(0)

    # (Cin, Cout, use_1x1conv): identity-shortcut case + 1x1-conv shortcut case
    configs = [(8, 8, False), (4, 8, True)]
    for cfg_id, (cin, cout, use_1x1) in enumerate(configs):
        kx, kp = jax.random.split(jax.random.fold_in(key, cfg_id))
        x = jax.random.normal(kx, (2, cin, 16, 16), jnp.float32)
        params = init_params(kp, cin, cout)

        fwd = make_vblock_forward(params, x.shape, use_1x1conv=use_1x1,
                                  strides=1, down_stride=2)
        out = jax.block_until_ready(fwd(x))

        ref = vblock_reference(x, params, use_1x1, 1, 2)
        assert out.shape == ref.shape, (out.shape, ref.shape)
        assert bool(jnp.all(jnp.isfinite(out)))
        # Mixed abs/rel tolerance: bf16 matmul operands bound accuracy to the
        # ~1% relative level; 0/1 selection matrices and BN stats are exact/f32.
        err = jnp.abs(out - ref)
        tol = 5e-2 + 5e-2 * jnp.abs(ref)
        if float(jnp.max(err - tol)) > 0.0:
            raise AssertionError(
                f"config {cfg_id}: kernel/reference mismatch "
                f"(max abs err {float(jnp.max(err)):.4f})")

    print("KERNEL_OK")
</pallas_src>

<mosaic_0001>
module attributes {stable_mosaic.version = 11 : i64} {
  func.func @_vblock_kernel(%arg0: memref<36x384xbf16, #tpu.memory_space<vmem>>, %arg1: memref<16x128xbf16, #tpu.memory_space<vmem>>, %arg2: memref<36x1xf32, #tpu.memory_space<vmem>>, %arg3: memref<34x1xf32, #tpu.memory_space<vmem>>, %arg4: memref<384x128xbf16, #tpu.memory_space<vmem>>, %arg5: memref<384x128xbf16, #tpu.memory_space<vmem>>, %arg6: memref<128x128xbf16, #tpu.memory_space<vmem>>, %arg7: memref<128x128xbf16, #tpu.memory_space<vmem>>, %arg8: memref<6x128xf32, #tpu.memory_space<vmem>>, %arg9: memref<3x128xf32, #tpu.memory_space<vmem>>, %arg10: memref<128x128xf32, #tpu.memory_space<vmem>>, %arg11: memref<128x128xf32, #tpu.memory_space<vmem>>, %arg12: memref<16x34xbf16, #tpu.memory_space<vmem>>, %arg13: memref<16x128xf32, #tpu.memory_space<vmem>>, %arg14: memref<36x128xf32, #tpu.memory_space<vmem>>) attributes {dimension_semantics = [], scalar_prefetch = 0 : i64, scratch_operands = 1 : i64, tpu.core_type = #tpu.core_type<tc>} {
    %c0 = arith.constant 0 : index
    %c0_0 = arith.constant 0 : index
    %0 = vector.load %arg8[%c0, %c0_0] : memref<6x128xf32, #tpu.memory_space<vmem>>, vector<1x128xf32>
    %c1 = arith.constant 1 : index
    %c0_1 = arith.constant 0 : index
    %1 = vector.load %arg8[%c1, %c0_1] : memref<6x128xf32, #tpu.memory_space<vmem>>, vector<1x128xf32>
    %c2 = arith.constant 2 : index
    %c0_2 = arith.constant 0 : index
    %2 = vector.load %arg8[%c2, %c0_2] : memref<6x128xf32, #tpu.memory_space<vmem>>, vector<1x128xf32>
    %c3 = arith.constant 3 : index
    %c0_3 = arith.constant 0 : index
    %3 = vector.load %arg8[%c3, %c0_3] : memref<6x128xf32, #tpu.memory_space<vmem>>, vector<1x128xf32>
    %c4 = arith.constant 4 : index
    %c0_4 = arith.constant 0 : index
    %4 = vector.load %arg8[%c4, %c0_4] : memref<6x128xf32, #tpu.memory_space<vmem>>, vector<1x128xf32>
    %c5 = arith.constant 5 : index
    %c0_5 = arith.constant 0 : index
    %5 = vector.load %arg8[%c5, %c0_5] : memref<6x128xf32, #tpu.memory_space<vmem>>, vector<1x128xf32>
    %c0_6 = arith.constant 0 : index
    %c0_7 = arith.constant 0 : index
    %6 = vector.load %arg2[%c0_6, %c0_7] : memref<36x1xf32, #tpu.memory_space<vmem>>, vector<36x1xf32>
    %c0_8 = arith.constant 0 : index
    %c0_9 = arith.constant 0 : index
    %7 = vector.load %arg3[%c0_8, %c0_9] : memref<34x1xf32, #tpu.memory_space<vmem>>, vector<34x1xf32>
    %c0_10 = arith.constant 0 : index
    %c0_11 = arith.constant 0 : index
    %8 = vector.load %arg0[%c0_10, %c0_11] : memref<36x384xbf16, #tpu.memory_space<vmem>>, vector<36x384xbf16>
    %c0_12 = arith.constant 0 : index
    %c0_13 = arith.constant 0 : index
    %9 = vector.load %arg4[%c0_12, %c0_13] : memref<384x128xbf16, #tpu.memory_space<vmem>>, vector<384x128xbf16>
    %cst = arith.constant dense<0.000000e+00> : vector<36x128xf32>
    %10 = tpu.matmul %8, %9, %cst {dimension_numbers = #tpu.dot_dimension_numbers<[1], [0], [0], [1], [0, 0, 1, 1], [], []>} : vector<36x384xbf16>, vector<384x128xbf16>, vector<36x128xf32> -> vector<36x128xf32>
    %11 = vector.broadcast %0 : vector<1x128xf32> to vector<36x128xf32>
    %12 = arith.addf %10, %11 : vector<36x128xf32>
    %13 = vector.broadcast %6 : vector<36x1xf32> to vector<36x128xf32>
    %14 = arith.mulf %12, %13 : vector<36x128xf32>
    %cst_14 = arith.constant dense<0.000000e+00> : vector<128xf32>
    %15 = vector.multi_reduction <add>, %14, %cst_14 [0] : vector<36x128xf32> to vector<128xf32>
    %16 = vector.shape_cast %15 : vector<128xf32> to vector<1x128xf32>
    %17 = arith.mulf %14, %14 : vector<36x128xf32>
    %cst_15 = arith.constant dense<0.000000e+00> : vector<128xf32>
    %18 = vector.multi_reduction <add>, %17, %cst_15 [0] : vector<36x128xf32> to vector<128xf32>
    %19 = vector.shape_cast %18 : vector<128xf32> to vector<1x128xf32>
    %c0_16 = arith.constant 0 : index
    %c0_17 = arith.constant 0 : index
    %20 = vector.load %arg10[%c0_16, %c0_17] : memref<128x128xf32, #tpu.memory_space<vmem>>, vector<128x128xf32>
    %cst_18 = arith.constant dense<0.000000e+00> : vector<1x128xf32>
    %21 = tpu.matmul %16, %20, %cst_18 {dimension_numbers = #tpu.dot_dimension_numbers<[1], [0], [0], [1], [0, 0, 1, 1], [], []>} : vector<1x128xf32>, vector<128x128xf32>, vector<1x128xf32> -> vector<1x128xf32>
    %cst_19 = arith.constant 0.001953125 : f32
    %22 = vector.broadcast %cst_19 : f32 to vector<1x128xf32>
    %23 = arith.mulf %21, %22 : vector<1x128xf32>
    %cst_20 = arith.constant dense<0.000000e+00> : vector<1x128xf32>
    %24 = tpu.matmul %19, %20, %cst_20 {dimension_numbers = #tpu.dot_dimension_numbers<[1], [0], [0], [1], [0, 0, 1, 1], [], []>} : vector<1x128xf32>, vector<128x128xf32>, vector<1x128xf32> -> vector<1x128xf32>
    %cst_21 = arith.constant 0.001953125 : f32
    %25 = vector.broadcast %cst_21 : f32 to vector<1x128xf32>
    %26 = arith.mulf %24, %25 : vector<1x128xf32>
    %27 = arith.mulf %23, %23 : vector<1x128xf32>
    %28 = arith.subf %26, %27 : vector<1x128xf32>
    %cst_22 = arith.constant 9.99999974E-6 : f32
    %29 = vector.broadcast %cst_22 : f32 to vector<1x128xf32>
    %30 = arith.addf %28, %29 : vector<1x128xf32>
    %31 = math.rsqrt %30 : vector<1x128xf32>
    %32 = vector.broadcast %23 : vector<1x128xf32> to vector<36x128xf32>
    %33 = arith.subf %12, %32 : vector<36x128xf32>
    %34 = arith.mulf %31, %2 : vector<1x128xf32>
    %35 = vector.broadcast %34 : vector<1x128xf32> to vector<36x128xf32>
    %36 = arith.mulf %33, %35 : vector<36x128xf32>
    %37 = vector.broadcast %3 : vector<1x128xf32> to vector<36x128xf32>
    %38 = arith.addf %36, %37 : vector<36x128xf32>
    %cst_23 = arith.constant 0.000000e+00 : f32
    %39 = vector.broadcast %cst_23 : f32 to vector<36x128xf32>
    %40 = arith.cmpf oge, %38, %39 : vector<36x128xf32>
    %cst_24 = arith.constant 0.00999999977 : f32
    %41 = vector.broadcast %cst_24 : f32 to vector<36x128xf32>
    %42 = arith.mulf %41, %38 : vector<36x128xf32>
    %43 = arith.select %40, %38, %42 : vector<36x128xi1>, vector<36x128xf32>
    %44 = vector.broadcast %6 : vector<36x1xf32> to vector<36x128xf32>
    %45 = arith.mulf %43, %44 : vector<36x128xf32>
    %c0_25 = arith.constant 0 : index
    %c0_26 = arith.constant 0 : index
    %46 = vector.load %arg14[%c0_25, %c0_26] : memref<36x128xf32, #tpu.memory_space<vmem>>, vector<36x128xf32>
    tpu.vector_store %arg14[%c0_25, %c0_26], %45 {strides = array<i32>} : memref<36x128xf32, #tpu.memory_space<vmem>>, vector<36x128xf32>,
    %c0_27 = arith.constant 0 : index
    %c0_28 = arith.constant 0 : index
    %47 = vector.load %arg14[%c0_27, %c0_28] : memref<36x128xf32, #tpu.memory_space<vmem>>, vector<34x128xf32>
    %c1_29 = arith.constant 1 : index
    %c0_30 = arith.constant 0 : index
    %48 = vector.load %arg14[%c1_29, %c0_30] : memref<36x128xf32, #tpu.memory_space<vmem>>, vector<34x128xf32>
    %c2_31 = arith.constant 2 : index
    %c0_32 = arith.constant 0 : index
    %49 = vector.load %arg14[%c2_31, %c0_32] : memref<36x128xf32, #tpu.memory_space<vmem>>, vector<34x128xf32>
    %50 = tpu.concatenate %47, %48, %49 in 1 : vector<34x128xf32>, vector<34x128xf32>, vector<34x128xf32> -> vector<34x384xf32>
    %51 = arith.truncf %50 : vector<34x384xf32> to vector<34x384xbf16>
    %c0_33 = arith.constant 0 : index
    %c0_34 = arith.constant 0 : index
    %52 = vector.load %arg5[%c0_33, %c0_34] : memref<384x128xbf16, #tpu.memory_space<vmem>>, vector<384x128xbf16>
    %cst_35 = arith.constant dense<0.000000e+00> : vector<34x128xf32>
    %53 = tpu.matmul %51, %52, %cst_35 {dimension_numbers = #tpu.dot_dimension_numbers<[1], [0], [0], [1], [0, 0, 1, 1], [], []>} : vector<34x384xbf16>, vector<384x128xbf16>, vector<34x128xf32> -> vector<34x128xf32>
    %54 = vector.broadcast %1 : vector<1x128xf32> to vector<34x128xf32>
    %55 = arith.addf %53, %54 : vector<34x128xf32>
    %cst_36 = arith.constant 0.000000e+00 : f32
    %56 = vector.broadcast %cst_36 : f32 to vector<34x128xf32>
    %57 = arith.cmpf oge, %55, %56 : vector<34x128xf32>
    %cst_37 = arith.constant 0.00999999977 : f32
    %58 = vector.broadcast %cst_37 : f32 to vector<34x128xf32>
    %59 = arith.mulf %58, %55 : vector<34x128xf32>
    %60 = arith.select %57, %55, %59 : vector<34x128xi1>, vector<34x128xf32>
    %61 = vector.broadcast %7 : vector<34x1xf32> to vector<34x128xf32>
    %62 = arith.mulf %60, %61 : vector<34x128xf32>
    %cst_38 = arith.constant dense<0.000000e+00> : vector<128xf32>
    %63 = vector.multi_reduction <add>, %62, %cst_38 [0] : vector<34x128xf32> to vector<128xf32>
    %64 = vector.shape_cast %63 : vector<128xf32> to vector<1x128xf32>
    %65 = arith.mulf %62, %62 : vector<34x128xf32>
    %cst_39 = arith.constant dense<0.000000e+00> : vector<128xf32>
    %66 = vector.multi_reduction <add>, %65, %cst_39 [0] : vector<34x128xf32> to vector<128xf32>
    %67 = vector.shape_cast %66 : vector<128xf32> to vector<1x128xf32>
    %c0_40 = arith.constant 0 : index
    %c0_41 = arith.constant 0 : index
    %68 = vector.load %arg10[%c0_40, %c0_41] : memref<128x128xf32, #tpu.memory_space<vmem>>, vector<128x128xf32>
    %cst_42 = arith.constant dense<0.000000e+00> : vector<1x128xf32>
    %69 = tpu.matmul %64, %68, %cst_42 {dimension_numbers = #tpu.dot_dimension_numbers<[1], [0], [0], [1], [0, 0, 1, 1], [], []>} : vector<1x128xf32>, vector<128x128xf32>, vector<1x128xf32> -> vector<1x128xf32>
    %cst_43 = arith.constant 0.001953125 : f32
    %70 = vector.broadcast %cst_43 : f32 to vector<1x128xf32>
    %71 = arith.mulf %69, %70 : vector<1x128xf32>
    %cst_44 = arith.constant dense<0.000000e+00> : vector<1x128xf32>
    %72 = tpu.matmul %67, %68, %cst_44 {dimension_numbers = #tpu.dot_dimension_numbers<[1], [0], [0], [1], [0, 0, 1, 1], [], []>} : vector<1x128xf32>, vector<128x128xf32>, vector<1x128xf32> -> vector<1x128xf32>
    %cst_45 = arith.constant 0.001953125 : f32
    %73 = vector.broadcast %cst_45 : f32 to vector<1x128xf32>
    %74 = arith.mulf %72, %73 : vector<1x128xf32>
    %75 = arith.mulf %71, %71 : vector<1x128xf32>
    %76 = arith.subf %74, %75 : vector<1x128xf32>
    %cst_46 = arith.constant 9.99999974E-6 : f32
    %77 = vector.broadcast %cst_46 : f32 to vector<1x128xf32>
    %78 = arith.addf %76, %77 : vector<1x128xf32>
    %79 = math.rsqrt %78 : vector<1x128xf32>
    %80 = vector.broadcast %71 : vector<1x128xf32> to vector<34x128xf32>
    %81 = arith.subf %60, %80 : vector<34x128xf32>
    %82 = arith.mulf %79, %4 : vector<1x128xf32>
    %83 = vector.broadcast %82 : vector<1x128xf32> to vector<34x128xf32>
    %84 = arith.mulf %81, %83 : vector<34x128xf32>
    %85 = vector.broadcast %5 : vector<1x128xf32> to vector<34x128xf32>
    %86 = arith.addf %84, %85 : vector<34x128xf32>
    %c0_47 = arith.constant 0 : index
    %c0_48 = arith.constant 0 : index
    %87 = vector.load %arg12[%c0_47, %c0_48] : memref<16x34xbf16, #tpu.memory_space<vmem>>, vector<16x34xbf16>
    %88 = arith.truncf %86 : vector<34x128xf32> to vector<34x128xbf16>
    %cst_49 = arith.constant dense<0.000000e+00> : vector<16x128xf32>
    %89 = tpu.matmul %87, %88, %cst_49 {dimension_numbers = #tpu.dot_dimension_numbers<[1], [0], [0], [1], [0, 0, 1, 1], [], []>} : vector<16x34xbf16>, vector<34x128xbf16>, vector<16x128xf32> -> vector<16x128xf32>
    %90 = arith.truncf %89 : vector<16x128xf32> to vector<16x128xbf16>
    %c0_50 = arith.constant 0 : index
    %c0_51 = arith.constant 0 : index
    %91 = vector.load %arg6[%c0_50, %c0_51] : memref<128x128xbf16, #tpu.memory_space<vmem>>, vector<128x128xbf16>
    %cst_52 = arith.constant dense<0.000000e+00> : vector<16x128xf32>
    %92 = tpu.matmul %90, %91, %cst_52 {dimension_numbers = #tpu.dot_dimension_numbers<[1], [0], [0], [1], [0, 0, 1, 1], [], []>} : vector<16x128xbf16>, vector<128x128xbf16>, vector<16x128xf32> -> vector<16x128xf32>
    %c0_53 = arith.constant 0 : index
    %c0_54 = arith.constant 0 : index
    %93 = vector.load %arg1[%c0_53, %c0_54] : memref<16x128xbf16, #tpu.memory_space<vmem>>, vector<16x128xbf16>
    %c0_55 = arith.constant 0 : index
    %c0_56 = arith.constant 0 : index
    %94 = vector.load %arg7[%c0_55, %c0_56] : memref<128x128xbf16, #tpu.memory_space<vmem>>, vector<128x128xbf16>
    %cst_57 = arith.constant dense<0.000000e+00> : vector<16x128xf32>
    %95 = tpu.matmul %93, %94, %cst_57 {dimension_numbers = #tpu.dot_dimension_numbers<[1], [0], [0], [1], [0, 0, 1, 1], [], []>} : vector<16x128xbf16>, vector<128x128xbf16>, vector<16x128xf32> -> vector<16x128xf32>
    %96 = arith.addf %92, %95 : vector<16x128xf32>
    %c0_58 = arith.constant 0 : index
    %c0_59 = arith.constant 0 : index
    %97 = vector.load %arg9[%c0_58, %c0_59] : memref<3x128xf32, #tpu.memory_space<vmem>>, vector<1x128xf32>
    %98 = vector.broadcast %97 : vector<1x128xf32> to vector<16x128xf32>
    %99 = arith.addf %96, %98 : vector<16x128xf32>
    %c1_60 = arith.constant 1 : index
    %c0_61 = arith.constant 0 : index
    %100 = vector.load %arg9[%c1_60, %c0_61] : memref<3x128xf32, #tpu.memory_space<vmem>>, vector<1x128xf32>
    %c2_62 = arith.constant 2 : index
    %c0_63 = arith.constant 0 : index
    %101 = vector.load %arg9[%c2_62, %c0_63] : memref<3x128xf32, #tpu.memory_space<vmem>>, vector<1x128xf32>
    %cst_64 = arith.constant dense<0.000000e+00> : vector<128xf32>
    %102 = vector.multi_reduction <add>, %99, %cst_64 [0] : vector<16x128xf32> to vector<128xf32>
    %103 = vector.shape_cast %102 : vector<128xf32> to vector<1x128xf32>
    %104 = arith.mulf %99, %99 : vector<16x128xf32>
    %cst_65 = arith.constant dense<0.000000e+00> : vector<128xf32>
    %105 = vector.multi_reduction <add>, %104, %cst_65 [0] : vector<16x128xf32> to vector<128xf32>
    %106 = vector.shape_cast %105 : vector<128xf32> to vector<1x128xf32>
    %c0_66 = arith.constant 0 : index
    %c0_67 = arith.constant 0 : index
    %107 = vector.load %arg11[%c0_66, %c0_67] : memref<128x128xf32, #tpu.memory_space<vmem>>, vector<128x128xf32>
    %cst_68 = arith.constant dense<0.000000e+00> : vector<1x128xf32>
    %108 = tpu.matmul %103, %107, %cst_68 {dimension_numbers = #tpu.dot_dimension_numbers<[1], [0], [0], [1], [0, 0, 1, 1], [], []>} : vector<1x128xf32>, vector<128x128xf32>, vector<1x128xf32> -> vector<1x128xf32>
    %cst_69 = arith.constant 7.812500e-03 : f32
    %109 = vector.broadcast %cst_69 : f32 to vector<1x128xf32>
    %110 = arith.mulf %108, %109 : vector<1x128xf32>
    %cst_70 = arith.constant dense<0.000000e+00> : vector<1x128xf32>
    %111 = tpu.matmul %106, %107, %cst_70 {dimension_numbers = #tpu.dot_dimension_numbers<[1], [0], [0], [1], [0, 0, 1, 1], [], []>} : vector<1x128xf32>, vector<128x128xf32>, vector<1x128xf32> -> vector<1x128xf32>
    %cst_71 = arith.constant 7.812500e-03 : f32
    %112 = vector.broadcast %cst_71 : f32 to vector<1x128xf32>
    %113 = arith.mulf %111, %112 : vector<1x128xf32>
    %114 = arith.mulf %110, %110 : vector<1x128xf32>
    %115 = arith.subf %113, %114 : vector<1x128xf32>
    %cst_72 = arith.constant 9.99999974E-6 : f32
    %116 = vector.broadcast %cst_72 : f32 to vector<1x128xf32>
    %117 = arith.addf %115, %116 : vector<1x128xf32>
    %118 = math.rsqrt %117 : vector<1x128xf32>
    %119 = vector.broadcast %110 : vector<1x128xf32> to vector<16x128xf32>
    %120 = arith.subf %99, %119 : vector<16x128xf32>
    %121 = arith.mulf %118, %100 : vector<1x128xf32>
    %122 = vector.broadcast %121 : vector<1x128xf32> to vector<16x128xf32>
    %123 = arith.mulf %120, %122 : vector<16x128xf32>
    %124 = vector.broadcast %101 : vector<1x128xf32> to vector<16x128xf32>
    %125 = arith.addf %123, %124 : vector<16x128xf32>
    %cst_73 = arith.constant 2.000000e+01 : f32
    %126 = vector.broadcast %cst_73 : f32 to vector<16x128xf32>
    %127 = arith.cmpf ogt, %125, %126 : vector<16x128xf32>
    %128 = math.exp %125 : vector<16x128xf32>
    %cst_74 = arith.constant 1.000000e+00 : f32
    %129 = vector.broadcast %cst_74 : f32 to vector<16x128xf32>
    %130 = arith.addf %129, %128 : vector<16x128xf32>
    %131 = math.log %130 : vector<16x128xf32>
    %132 = arith.select %127, %125, %131 : vector<16x128xi1>, vector<16x128xf32>
    %c0_75 = arith.constant 0 : index
    %c0_76 = arith.constant 0 : index
    %133 = vector.load %arg13[%c0_75, %c0_76] : memref<16x128xf32, #tpu.memory_space<vmem>>, vector<16x128xf32>
    tpu.vector_store %arg13[%c0_75, %c0_76], %132 {strides = array<i32>} : memref<16x128xf32, #tpu.memory_space<vmem>>, vector<16x128xf32>,
    return
  }
}

</mosaic_0001>

<llo_original>
// kernel: forward.1
$region0: #{forward.1}
  #allocation0 [shape = 'u32[]', space=smem, size = 0x4, offset = 0x4, fixed_abs, tag = 'smem constant byte address 0x4 - core index']
  #allocation1 [shape = 'u32[144,128]{1,0:T(1,128)}', space=vmem, size = 0x12000, scoped, tag = 'internal scratch']
  #allocation2 [shape = 'f32[36,128]{1,0:T(8,128)}', space=vmem, size = 0x5000, scoped, tag = 'scratch operand']
  %s0 = inlined_call_operand.vmem [shape: bf16[36,384], index: 0, kind: input, shape index: {}]
  %s1 = inlined_call_operand.vmem [shape: bf16[16,128], index: 1, kind: input, shape index: {}]
  %s2 = inlined_call_operand.vmem [shape: f32[36,1], index: 2, kind: input, shape index: {}]
  %s3 = inlined_call_operand.vmem [shape: f32[34,1], index: 3, kind: input, shape index: {}]
  %s4 = inlined_call_operand.vmem [shape: bf16[384,128], index: 4, kind: input, shape index: {}]
  %s5 = inlined_call_operand.vmem [shape: bf16[384,128], index: 5, kind: input, shape index: {}]
  %s6 = inlined_call_operand.vmem [shape: bf16[128,128], index: 6, kind: input, shape index: {}, may-alias: {6,7}]
  %s7 = inlined_call_operand.vmem [shape: bf16[128,128], index: 7, kind: input, shape index: {}, may-alias: {6,7}]
  %s8 = inlined_call_operand.vmem [shape: f32[6,128], index: 8, kind: input, shape index: {}]
  %s9 = inlined_call_operand.vmem [shape: f32[3,128], index: 9, kind: input, shape index: {}]
  %s10 = inlined_call_operand.vmem [shape: f32[128,128], index: 10, kind: input, shape index: {}]
  %s11 = inlined_call_operand.vmem [shape: f32[128,128], index: 11, kind: input, shape index: {}]
  %s12 = inlined_call_operand.vmem [shape: bf16[16,34], index: 12, kind: input, shape index: {}]
  %s13 = inlined_call_operand.vmem [shape: f32[16,128], index: 13, kind: output, shape index: {}]
  %s14 = sld [smem:[#allocation0]]
  $region62: #{forward.1} parent=0
    _
  %s16 = ssub.s32 1, %s14
  %s17 = scalar_select 0, %s16, %s14
  // Predicated region
  $region2: #{forward.1} parent=0 // pred_check
    _
  $region3: #{forward.1} parent=0 // pred_check_branch
    %19 = sbr.rel (0) target = $region5
  $region4: #{forward.1} parent=0 // pred_region
    _
  $region5: #{forward.1} parent=0 // pred_fallthru
    _
  // Predicated region
  $region6: #{forward.1} parent=0 // pred_check
    _
  $region7: #{forward.1} parent=0 // pred_check_branch
    %21 = sbr.rel (0) target = $region9
  $region8: #{forward.1} parent=0 // pred_region
    _
  $region9: #{forward.1} parent=0 // pred_fallthru
    _
  // Predicated region
  $region10: #{forward.1} parent=0 // pred_check
    _
  $region11: #{forward.1} parent=0 // pred_check_branch
    %23 = sbr.rel (0) target = $region13
  $region12: #{forward.1} parent=0 // pred_region
    _
  $region13: #{forward.1} parent=0 // pred_fallthru
    _
  // Predicated region
  $region14: #{forward.1} parent=0 // pred_check
    _
  $region15: #{forward.1} parent=0 // pred_check_branch
    %25 = sbr.rel (0) target = $region17
  $region16: #{forward.1} parent=0 // pred_region
    _
  $region17: #{forward.1} parent=0 // pred_fallthru
    _
  // Predicated region
  $region18: #{forward.1} parent=0 // pred_check
    _
  $region19: #{forward.1} parent=0 // pred_check_branch
    %27 = sbr.rel (0) target = $region21
  $region20: #{forward.1} parent=0 // pred_region
    _
  $region21: #{forward.1} parent=0 // pred_fallthru
    _
  // Predicated region
  $region22: #{forward.1} parent=0 // pred_check
    _
  $region23: #{forward.1} parent=0 // pred_check_branch
    %29 = sbr.rel (0) target = $region25
  $region24: #{forward.1} parent=0 // pred_region
    _
  $region25: #{forward.1} parent=0 // pred_fallthru
    _
  // Predicated region
  $region26: #{forward.1} parent=0 // pred_check
    _
  $region27: #{forward.1} parent=0 // pred_check_branch
    %31 = sbr.rel (0) target = $region29
  $region28: #{forward.1} parent=0 // pred_region
    _
  $region29: #{forward.1} parent=0 // pred_fallthru
    _
  // Predicated region
  $region30: #{forward.1} parent=0 // pred_check
    _
  $region31: #{forward.1} parent=0 // pred_check_branch
    %33 = sbr.rel (0) target = $region33
  $region32: #{forward.1} parent=0 // pred_region
    _
  $region33: #{forward.1} parent=0 // pred_fallthru
    _
  // Predicated region
  $region34: #{forward.1} parent=0 // pred_check
    _
  $region35: #{forward.1} parent=0 // pred_check_branch
    %35 = sbr.rel (0) target = $region37
  $region36: #{forward.1} parent=0 // pred_region
    _
  $region37: #{forward.1} parent=0 // pred_fallthru
    _
  // Predicated region
  $region38: #{forward.1} parent=0 // pred_check
    _
  $region39: #{forward.1} parent=0 // pred_check_branch
    %37 = sbr.rel (0) target = $region41
  $region40: #{forward.1} parent=0 // pred_region
    _
  $region41: #{forward.1} parent=0 // pred_fallthru
    _
  // Predicated region
  $region42: #{forward.1} parent=0 // pred_check
    _
  $region43: #{forward.1} parent=0 // pred_check_branch
    %39 = sbr.rel (0) target = $region45
  $region44: #{forward.1} parent=0 // pred_region
    _
  $region45: #{forward.1} parent=0 // pred_fallthru
    _
  // Predicated region
  $region46: #{forward.1} parent=0 // pred_check
    _
  $region47: #{forward.1} parent=0 // pred_check_branch
    %41 = sbr.rel (0) target = $region49
  $region48: #{forward.1} parent=0 // pred_region
    _
  $region49: #{forward.1} parent=0 // pred_fallthru
    _
  // Predicated region
  $region50: #{forward.1} parent=0 // pred_check
    _
  $region51: #{forward.1} parent=0 // pred_check_branch
    %43 = sbr.rel (0) target = $region53
  $region52: #{forward.1} parent=0 // pred_region
    _
  $region53: #{forward.1} parent=0 // pred_fallthru
    _
  %v45 = vld [vmem:[%s8] sm:$0x1]
  %v46 = vld [vmem:[%s8 + $0x1] sm:$0x1]
  %v47 = vld [vmem:[%s8 + $0x2] sm:$0x1]
  %v48 = vld [vmem:[%s8 + $0x3] sm:$0x1]
  %v49 = vld [vmem:[%s8 + $0x4] sm:$0x1]
  %v50 = vld [vmem:[%s8 + $0x5] sm:$0x1]
  %v51 = vld [vmem:[%s2] sm:$0xff]
  %v52 = vld [vmem:[%s2 + $0x8] sm:$0xff]
  %v53 = vld [vmem:[%s2 + $0x10] sm:$0xff]
  %v54 = vld [vmem:[%s2 + $0x18] sm:$0xff]
  %v55 = vld [vmem:[%s2 + $0x20] sm:$0xf]
  %v56 = vld [vmem:[%s3] sm:$0xff]
  %v57 = vld [vmem:[%s3 + $0x8] sm:$0xff]
  %v58 = vld [vmem:[%s3 + $0x10] sm:$0xff]
  %v59 = vld [vmem:[%s3 + $0x18] sm:$0xff]
  %v60 = vld [vmem:[%s3 + $0x20] sm:$0x3]
  %v61 = vld [vmem:[%s0] sm:$0xff]
  %v62 = vld [vmem:[%s0 + $0x8] sm:$0xf]
  %v63 = vld [vmem:[%s0 + $0xc] sm:$0xff]
  %v64 = vld [vmem:[%s0 + $0x14] sm:$0xf]
  %v65 = vld [vmem:[%s0 + $0x18] sm:$0xff]
  %v66 = vld [vmem:[%s0 + $0x20] sm:$0xf]
  %v67 = vld [vmem:[%s0 + $0x24] sm:$0xff]
  %v68 = vld [vmem:[%s0 + $0x2c] sm:$0xf]
  %v69 = vld [vmem:[%s0 + $0x30] sm:$0x33]
  %v70 = vld [vmem:[%s0 + $0x38] sm:$0x3]
  %v71 = vld [vmem:[%s4] sm:$0xf]
  %v72 = vld [vmem:[%s4 + $0x4] sm:$0xf]
  %v73 = vld [vmem:[%s4 + $0x8] sm:$0xf]
  %v74 = vld [vmem:[%s4 + $0xc] sm:$0xf]
  %v75 = vld [vmem:[%s4 + $0x10] sm:$0xf]
  %v76 = vld [vmem:[%s4 + $0x14] sm:$0xf]
  %v77 = vld [vmem:[%s4 + $0x18] sm:$0xf]
  %v78 = vld [vmem:[%s4 + $0x1c] sm:$0xf]
  %v79 = vld [vmem:[%s4 + $0x20] sm:$0xf]
  %v80 = vld [vmem:[%s4 + $0x24] sm:$0xf]
  %v81 = vld [vmem:[%s4 + $0x28] sm:$0xf]
  %v82 = vld [vmem:[%s4 + $0x2c] sm:$0xf]
  %v83 = vld [vmem:[%s4 + $0x30] sm:$0xf]
  %v84 = vld [vmem:[%s4 + $0x34] sm:$0xf]
  %v85 = vld [vmem:[%s4 + $0x38] sm:$0xf]
  %v86 = vld [vmem:[%s4 + $0x3c] sm:$0xf]
  %v87 = vld [vmem:[%s4 + $0x40] sm:$0xf]
  %v88 = vld [vmem:[%s4 + $0x44] sm:$0xf]
  %v89 = vld [vmem:[%s4 + $0x48] sm:$0xf]
  %v90 = vld [vmem:[%s4 + $0x4c] sm:$0xf]
  %v91 = vld [vmem:[%s4 + $0x50] sm:$0xf]
  %v92 = vld [vmem:[%s4 + $0x54] sm:$0xf]
  %v93 = vld [vmem:[%s4 + $0x58] sm:$0xf]
  %v94 = vld [vmem:[%s4 + $0x5c] sm:$0xf]
  %v95 = vld [vmem:[%s4 + $0x60] sm:$0xf]
  %v96 = vld [vmem:[%s4 + $0x64] sm:$0xf]
  %v97 = vld [vmem:[%s4 + $0x68] sm:$0xf]
  %v98 = vld [vmem:[%s4 + $0x6c] sm:$0xf]
  %v99 = vld [vmem:[%s4 + $0x70] sm:$0xf]
  %v100 = vld [vmem:[%s4 + $0x74] sm:$0xf]
  %v101 = vld [vmem:[%s4 + $0x78] sm:$0xf]
  %v102 = vld [vmem:[%s4 + $0x7c] sm:$0xf]
  %v103 = vld [vmem:[%s4 + $0x80] sm:$0xf]
  %v104 = vld [vmem:[%s4 + $0x84] sm:$0xf]
  %v105 = vld [vmem:[%s4 + $0x88] sm:$0xf]
  %v106 = vld [vmem:[%s4 + $0x8c] sm:$0xf]
  %v107 = vld [vmem:[%s4 + $0x90] sm:$0xf]
  %v108 = vld [vmem:[%s4 + $0x94] sm:$0xf]
  %v109 = vld [vmem:[%s4 + $0x98] sm:$0xf]
  %v110 = vld [vmem:[%s4 + $0x9c] sm:$0xf]
  %v111 = vld [vmem:[%s4 + $0xa0] sm:$0xf]
  %v112 = vld [vmem:[%s4 + $0xa4] sm:$0xf]
  %v113 = vld [vmem:[%s4 + $0xa8] sm:$0xf]
  %v114 = vld [vmem:[%s4 + $0xac] sm:$0xf]
  %v115 = vld [vmem:[%s4 + $0xb0] sm:$0xf]
  %v116 = vld [vmem:[%s4 + $0xb4] sm:$0xf]
  %v117 = vld [vmem:[%s4 + $0xb8] sm:$0xf]
  %v118 = vld [vmem:[%s4 + $0xbc] sm:$0xf]
  %v119 = vlaneseq
  %v120 = vshrl.u32 %v119, 7
  %v121 = vsub.s32 0, %v120
  %v122 = vrot.slane %v45, %v121
  %v133 = vunpack.c.l.b16 %v61
  %v134 = vunpack.c.h.b16 %v61
  %v135 = vunpack.c.l.b16 %v62
  %v136 = vunpack.c.l.b16 %v63
  %v137 = vunpack.c.h.b16 %v63
  %v138 = vunpack.c.l.b16 %v64
  %v139 = vunpack.c.l.b16 %v65
  %v140 = vunpack.c.h.b16 %v65
  %v141 = vunpack.c.l.b16 %v66
  %v142 = vunpack.c.l.b16 %v67
  %v143 = vunpack.c.h.b16 %v67
  %v144 = vunpack.c.l.b16 %v68
  %v145 = vunpack.c.l.b16 %v69
  %v146 = vunpack.c.h.b16 %v69
  %v147 = vunpack.c.l.b16 %v70
  %v148 = vpack.c.b16 %v136, %v133
  %v149 = vpack.c.b16 %v137, %v134
  %v150 = vpack.c.b16 %v138, %v135
  %v151 = vpack.c.b16 %v142, %v139
  %v152 = vpack.c.b16 %v143, %v140
  %v153 = vpack.c.b16 %v144, %v141
  %v154 = vpack.c.b16 %v145, %v145
  %v155 = vpack.c.b16 %v146, %v146
  %v156 = vpack.c.b16 %v147, %v147
  %v214 = vunpack.c.l.b16 %v71
  %v215 = vunpack.c.l.b16 %v72
  %v216 = vunpack.c.l.b16 %v73
  %v217 = vunpack.c.l.b16 %v74
  %v218 = vunpack.c.l.b16 %v75
  %v219 = vunpack.c.l.b16 %v76
  %v220 = vunpack.c.l.b16 %v77
  %v221 = vunpack.c.l.b16 %v78
  %v222 = vunpack.c.l.b16 %v79
  %v223 = vunpack.c.l.b16 %v80
  %v224 = vunpack.c.l.b16 %v81
  %v225 = vunpack.c.l.b16 %v82
  %v226 = vunpack.c.l.b16 %v83
  %v227 = vunpack.c.l.b16 %v84
  %v228 = vunpack.c.l.b16 %v85
  %v229 = vunpack.c.l.b16 %v86
  %v230 = vunpack.c.l.b16 %v87
  %v231 = vunpack.c.l.b16 %v88
  %v232 = vunpack.c.l.b16 %v89
  %v233 = vunpack.c.l.b16 %v90
  %v234 = vunpack.c.l.b16 %v91
  %v235 = vunpack.c.l.b16 %v92
  %v236 = vunpack.c.l.b16 %v93
  %v237 = vunpack.c.l.b16 %v94
  %v238 = vunpack.c.l.b16 %v95
  %v239 = vunpack.c.l.b16 %v96
  %v240 = vunpack.c.l.b16 %v97
  %v241 = vunpack.c.l.b16 %v98
  %v242 = vunpack.c.l.b16 %v99
  %v243 = vunpack.c.l.b16 %v100
  %v244 = vunpack.c.l.b16 %v101
  %v245 = vunpack.c.l.b16 %v102
  %v246 = vunpack.c.l.b16 %v103
  %v247 = vunpack.c.l.b16 %v104
  %v248 = vunpack.c.l.b16 %v105
  %v249 = vunpack.c.l.b16 %v106
  %v250 = vunpack.c.l.b16 %v107
  %v251 = vunpack.c.l.b16 %v108
  %v252 = vunpack.c.l.b16 %v109
  %v253 = vunpack.c.l.b16 %v110
  %v254 = vunpack.c.l.b16 %v111
  %v255 = vunpack.c.l.b16 %v112
  %v256 = vunpack.c.l.b16 %v113
  %v257 = vunpack.c.l.b16 %v114
  %v258 = vunpack.c.l.b16 %v115
  %v259 = vunpack.c.l.b16 %v116
  %v260 = vunpack.c.l.b16 %v117
  %v261 = vunpack.c.l.b16 %v118
  %v262 = vpack.c.b16 %v215, %v214
  %v263 = vpack.c.b16 %v217, %v216
  %v264 = vpack.c.b16 %v219, %v218
  %v265 = vpack.c.b16 %v221, %v220
  %v266 = vpack.c.b16 %v223, %v222
  %v267 = vpack.c.b16 %v225, %v224
  %v268 = vpack.c.b16 %v227, %v226
  %v269 = vpack.c.b16 %v229, %v228
  %v270 = vpack.c.b16 %v231, %v230
  %v271 = vpack.c.b16 %v233, %v232
  %v272 = vpack.c.b16 %v235, %v234
  %v273 = vpack.c.b16 %v237, %v236
  %v274 = vpack.c.b16 %v239, %v238
  %v275 = vpack.c.b16 %v241, %v240
  %v276 = vpack.c.b16 %v243, %v242
  %v277 = vpack.c.b16 %v245, %v244
  %v278 = vpack.c.b16 %v247, %v246
  %v279 = vpack.c.b16 %v249, %v248
  %v280 = vpack.c.b16 %v251, %v250
  %v281 = vpack.c.b16 %v253, %v252
  %v282 = vpack.c.b16 %v255, %v254
  %v283 = vpack.c.b16 %v257, %v256
  %v284 = vpack.c.b16 %v259, %v258
  %v285 = vpack.c.b16 %v261, %v260
  %310 = vmatprep.subr.bf16.mxu0 0
  %311 = vmatpush1.bf16.msra.mxu0 %v262
  %312 = vmatprep.subr.bf16.mxu0 0
  %313 = vmatpush1.bf16.msra.mxu0 %v263
  %314 = vmatprep.subr.bf16.mxu0 0
  %315 = vmatpush1.bf16.msra.mxu0 %v264
  %316 = vmatprep.subr.bf16.mxu0 0
  %317 = vmatpush1.bf16.msra.mxu0 %v265
  %318 = vmatprep.subr.bf16.mxu0 0
  %319 = vmatpush1.bf16.msra.mxu0 %v266
  %320 = vmatprep.subr.bf16.mxu0 0
  %321 = vmatpush1.bf16.msra.mxu0 %v267
  %322 = vmatprep.subr.bf16.mxu0 0
  %323 = vmatpush1.bf16.msra.mxu0 %v268
  %324 = vmatprep.subr.bf16.mxu0 0
  %325 = vmatpush1.bf16.msra.mxu0 %v269
  %326 = vmatprep.subr.bf16.mxu0 0
  %327 = vmatpush1.bf16.msra.mxu0 %v270
  %328 = vmatprep.subr.bf16.mxu0 0
  %329 = vmatpush1.bf16.msra.mxu0 %v271
  %330 = vmatprep.subr.bf16.mxu0 0
  %331 = vmatpush1.bf16.msra.mxu0 %v272
  %332 = vmatprep.subr.bf16.mxu0 0
  %333 = vmatpush1.bf16.msra.mxu0 %v273
  %334 = vmatprep.subr.bf16.mxu0 0
  %335 = vmatpush1.bf16.msra.mxu0 %v274
  %336 = vmatprep.subr.bf16.mxu0 0
  %337 = vmatpush1.bf16.msra.mxu0 %v275
  %338 = vmatprep.subr.bf16.mxu0 0
  %339 = vmatpush1.bf16.msra.mxu0 %v276
  %340 = vmatprep.subr.bf16.mxu0 0
  %341 = vmatpush1.bf16.msra.mxu0 %v277
  %342 = vmatprep.mubr.bf16.mxu0 %v149
  %343 = vmatmul.mubr.bf16.gmra.mrb[0].mxu0 %v148
  %v344 = vpop.f32.mrb[0].mxu0
  %v345 = vadd.f32 %v122, %v344
  %v346 = vpop.f32.mrb[0].mxu0
  %v347 = vpop.f32.mrb[0].mxu0
  %v348 = vadd.f32 %v122, %v347
  %v349 = vpop.f32.mrb[0].mxu0
  %350 = vmatprep.mubr.bf16.mxu0 %v152
  %351 = vmatmul.mubr.bf16.gmra.mrb[0].mxu0 %v151
  %v352 = vpop.f32.mrb[0].mxu0
  %v353 = vadd.f32 %v122, %v352
  %v354 = vpop.f32.mrb[0].mxu0
  %v355 = vpop.f32.mrb[0].mxu0
  %v356 = vadd.f32 %v122, %v355
  %v357 = vpop.f32.mrb[0].mxu0
  %358 = vmatprep.mubr.bf16.mxu0 %v155
  %359 = vmatmul.mubr.bf16.gmra.mrb[0].mxu0 %v154
  %v360 = vpop.f32.mrb[0].mxu0
  %v361 = vadd.f32 %v122, %v360
  %v362 = vpop.f32.mrb[0].mxu0
  %v363 = vpop.f32.mrb[0].mxu0
  %v364 = vpop.f32.mrb[0].mxu0
  %365 = vdwg.mxu0
  %366 = vmatprep.subr.bf16.mxu0 0
  %367 = vmatpush1.bf16.msra.mxu0 %v278
  %368 = vmatprep.subr.bf16.mxu0 0
  %369 = vmatpush1.bf16.msra.mxu0 %v279
  %370 = vmatprep.subr.bf16.mxu0 0
  %371 = vmatpush1.bf16.msra.mxu0 %v280
  %372 = vmatprep.subr.bf16.mxu0 0
  %373 = vmatpush1.bf16.msra.mxu0 %v281
  %374 = vmatprep.subr.bf16.mxu0 0
  %375 = vmatpush1.bf16.msra.mxu0 %v282
  %376 = vmatprep.subr.bf16.mxu0 0
  %377 = vmatpush1.bf16.msra.mxu0 %v283
  %378 = vmatprep.subr.bf16.mxu0 0
  %379 = vmatpush1.bf16.msra.mxu0 %v284
  %380 = vmatprep.subr.bf16.mxu0 0
  %381 = vmatpush1.bf16.msra.mxu0 %v285
  %382 = vmatprep.subr.bf16.mxu0 0
  %383 = vmatpush1.bf16.msra.mxu0 0
  %384 = vmatprep.subr.bf16.mxu0 0
  %385 = vmatpush1.bf16.msra.mxu0 0
  %386 = vmatprep.subr.bf16.mxu0 0
  %387 = vmatpush1.bf16.msra.mxu0 0
  %388 = vmatprep.subr.bf16.mxu0 0
  %389 = vmatpush1.bf16.msra.mxu0 0
  %390 = vmatprep.subr.bf16.mxu0 0
  %391 = vmatpush1.bf16.msra.mxu0 0
  %392 = vmatprep.subr.bf16.mxu0 0
  %393 = vmatpush1.bf16.msra.mxu0 0
  %394 = vmatprep.subr.bf16.mxu0 0
  %395 = vmatpush1.bf16.msra.mxu0 0
  %396 = vmatprep.subr.bf16.mxu0 0
  %397 = vmatpush1.bf16.msra.mxu0 0
  %398 = vmatprep.mubr.bf16.mxu0 0
  %399 = vmatmul.mubr.bf16.gmra.mrb[0].mxu0 %v150
  %v400 = vpop.f32.mrb[0].mxu0
  %v401 = vadd.f32 %v345, %v400
  %v402 = vpop.f32.mrb[0].mxu0
  %v403 = vpop.f32.mrb[0].mxu0
  %v404 = vadd.f32 %v348, %v403
  %v405 = vpop.f32.mrb[0].mxu0
  %406 = vmatprep.mubr.bf16.mxu0 0
  %407 = vmatmul.mubr.bf16.gmra.mrb[0].mxu0 %v153
  %v408 = vpop.f32.mrb[0].mxu0
  %v409 = vadd.f32 %v353, %v408
  %v410 = vpop.f32.mrb[0].mxu0
  %v411 = vpop.f32.mrb[0].mxu0
  %v412 = vadd.f32 %v356, %v411
  %v413 = vpop.f32.mrb[0].mxu0
  %414 = vmatprep.mubr.bf16.mxu0 0
  %415 = vmatmul.mubr.bf16.gmra.mrb[0].mxu0 %v156
  %v416 = vpop.f32.mrb[0].mxu0
  %v417 = vadd.f32 %v361, %v416
  %v418 = vpop.f32.mrb[0].mxu0
  %v419 = vpop.f32.mrb[0].mxu0
  %v420 = vpop.f32.mrb[0].mxu0
  %421 = vdwg.mxu0
  %423 = vset.pattern.permute.xlu0 0
  %424 = vperm.xlu0 %423, %v51
  %v425 = vpop.permute.xlu0 %424
  %428 = vset.pattern.permute.xlu0 0
  %429 = vperm.xlu0 %428, %v52
  %v430 = vpop.permute.xlu0 %429
  %433 = vset.pattern.permute.xlu0 0
  %434 = vperm.xlu0 %433, %v53
  %v435 = vpop.permute.xlu0 %434
  %438 = vset.pattern.permute.xlu0 0
  %439 = vperm.xlu0 %438, %v54
  %v440 = vpop.permute.xlu0 %439
  %443 = vset.pattern.permute.xlu0 0
  %444 = vperm.xlu0 %443, %v55
  %v445 = vpop.permute.xlu0 %444
  %v447 = vmul.f32 %v401, %v425
  %v448 = vmul.f32 %v404, %v430
  %v449 = vmul.f32 %v409, %v435
  %v450 = vmul.f32 %v412, %v440
  %v451 = vmul.f32 %v417, %v445
  %v452 = vadd.f32 %v447, %v448
  %v453 = vadd.f32 %v452, %v449
  %v454 = vadd.f32 %v453, %v450
  %vm455 = vcmask 1043456
  %v456 = vsel %vm455, %v451, 0.0
  %v457 = vadd.f32 %v454, %v456
  %v458 = vrot.slane %v457, 4
  %v459 = vadd.f32 %v457, %v458
  %v460 = vrot.slane %v459, 2
  %v461 = vadd.f32 %v459, %v460
  %v462 = vrot.slane %v461, 1
  %v463 = vadd.f32 %v461, %v462
  %v464 = vmul.f32 %v447, %v447
  %v465 = vmul.f32 %v448, %v448
  %v466 = vmul.f32 %v449, %v449
  %v467 = vmul.f32 %v450, %v450
  %v468 = vmul.f32 %v451, %v451
  %v469 = vadd.f32 %v464, %v465
  %v470 = vadd.f32 %v469, %v466
  %v471 = vadd.f32 %v470, %v467
  %v472 = vsel %vm455, %v468, 0.0
  %v473 = vadd.f32 %v471, %v472
  %v474 = vrot.slane %v473, 4
  %v475 = vadd.f32 %v473, %v474
  %v476 = vrot.slane %v475, 2
  %v477 = vadd.f32 %v475, %v476
  %v478 = vrot.slane %v477, 1
  %v479 = vadd.f32 %v477, %v478
  %v480 = vld [vmem:[%s10] sm:$0xff]
  %v481 = vld [vmem:[%s10 + $0x8] sm:$0xff]
  %v482 = vld [vmem:[%s10 + $0x10] sm:$0xff]
  %v483 = vld [vmem:[%s10 + $0x18] sm:$0xff]
  %v484 = vld [vmem:[%s10 + $0x20] sm:$0xff]
  %v485 = vld [vmem:[%s10 + $0x28] sm:$0xff]
  %v486 = vld [vmem:[%s10 + $0x30] sm:$0xff]
  %v487 = vld [vmem:[%s10 + $0x38] sm:$0xff]
  %v488 = vld [vmem:[%s10 + $0x40] sm:$0xff]
  %v489 = vld [vmem:[%s10 + $0x48] sm:$0xff]
  %v490 = vld [vmem:[%s10 + $0x50] sm:$0xff]
  %v491 = vld [vmem:[%s10 + $0x58] sm:$0xff]
  %v492 = vld [vmem:[%s10 + $0x60] sm:$0xff]
  %v493 = vld [vmem:[%s10 + $0x68] sm:$0xff]
  %v494 = vld [vmem:[%s10 + $0x70] sm:$0xff]
  %v495 = vld [vmem:[%s10 + $0x78] sm:$0xff]
  %496 = vmatprep.subr.mxu0 0.0
  %497 = vmatpush1.msra.mxu0 %v480
  %498 = vmatprep.subr.mxu0 0.0
  %499 = vmatpush1.msra.mxu0 %v481
  %500 = vmatprep.subr.mxu0 0.0
  %501 = vmatpush1.msra.mxu0 %v482
  %502 = vmatprep.subr.mxu0 0.0
  %503 = vmatpush1.msra.mxu0 %v483
  %504 = vmatprep.subr.mxu0 0.0
  %505 = vmatpush1.msra.mxu0 %v484
  %506 = vmatprep.subr.mxu0 0.0
  %507 = vmatpush1.msra.mxu0 %v485
  %508 = vmatprep.subr.mxu0 0.0
  %509 = vmatpush1.msra.mxu0 %v486
  %510 = vmatprep.subr.mxu0 0.0
  %511 = vmatpush1.msra.mxu0 %v487
  %512 = vmatprep.subr.mxu0 0.0
  %513 = vmatpush1.msra.mxu0 %v488
  %514 = vmatprep.subr.mxu0 0.0
  %515 = vmatpush1.msra.mxu0 %v489
  %516 = vmatprep.subr.mxu0 0.0
  %517 = vmatpush1.msra.mxu0 %v490
  %518 = vmatprep.subr.mxu0 0.0
  %519 = vmatpush1.msra.mxu0 %v491
  %520 = vmatprep.subr.mxu0 0.0
  %521 = vmatpush1.msra.mxu0 %v492
  %522 = vmatprep.subr.mxu0 0.0
  %523 = vmatpush1.msra.mxu0 %v493
  %524 = vmatprep.subr.mxu0 0.0
  %525 = vmatpush1.msra.mxu0 %v494
  %526 = vmatprep.subr.mxu0 0.0
  %527 = vmatpush1.msra.mxu0 %v495
  %528 = vmatprep.subr.mxu0 0.0
  %529 = vmatpush1.msra.mxu0 0.0
  %530 = vmatprep.subr.mxu0 0.0
  %531 = vmatpush1.msra.mxu0 0.0
  %532 = vmatprep.subr.mxu0 0.0
  %533 = vmatpush1.msra.mxu0 0.0
  %534 = vmatprep.subr.mxu0 0.0
  %535 = vmatpush1.msra.mxu0 0.0
  %536 = vmatprep.subr.mxu0 0.0
  %537 = vmatpush1.msra.mxu0 0.0
  %538 = vmatprep.subr.mxu0 0.0
  %539 = vmatpush1.msra.mxu0 0.0
  %540 = vmatprep.subr.mxu0 0.0
  %541 = vmatpush1.msra.mxu0 0.0
  %542 = vmatprep.subr.mxu0 0.0
  %543 = vmatpush1.msra.mxu0 0.0
  %544 = vmatprep.subr.mxu0 0.0
  %545 = vmatpush1.msra.mxu0 0.0
  %546 = vmatprep.subr.mxu0 0.0
  %547 = vmatpush1.msra.mxu0 0.0
  %548 = vmatprep.subr.mxu0 0.0
  %549 = vmatpush1.msra.mxu0 0.0
  %550 = vmatprep.subr.mxu0 0.0
  %551 = vmatpush1.msra.mxu0 0.0
  %552 = vmatprep.subr.mxu0 0.0
  %553 = vmatpush1.msra.mxu0 0.0
  %554 = vmatprep.subr.mxu0 0.0
  %555 = vmatpush1.msra.mxu0 0.0
  %556 = vmatprep.subr.mxu0 0.0
  %557 = vmatpush1.msra.mxu0 0.0
  %558 = vmatprep.subr.mxu0 0.0
  %559 = vmatpush1.msra.mxu0 0.0
  %560 = vmatprep.mubr.f32.mxu0 0.0
  %561 = vmatmul.mubr.f32.gmra.mrb[0].mxu0 %v463
  %v562 = vpop.f32.mrb[0].mxu0
  %v563 = vadd.f32 0.0, %v562
  %v564 = vpop.f32.mrb[0].mxu0
  %565 = vdwg.mxu0
  %v566 = vmul.f32 %v563, 0.001953125
  %567 = vmatprep.subr.mxu0 0.0
  %568 = vmatpush1.msra.mxu0 %v480
  %569 = vmatprep.subr.mxu0 0.0
  %570 = vmatpush1.msra.mxu0 %v481
  %571 = vmatprep.subr.mxu0 0.0
  %572 = vmatpush1.msra.mxu0 %v482
  %573 = vmatprep.subr.mxu0 0.0
  %574 = vmatpush1.msra.mxu0 %v483
  %575 = vmatprep.subr.mxu0 0.0
  %576 = vmatpush1.msra.mxu0 %v484
  %577 = vmatprep.subr.mxu0 0.0
  %578 = vmatpush1.msra.mxu0 %v485
  %579 = vmatprep.subr.mxu0 0.0
  %580 = vmatpush1.msra.mxu0 %v486
  %581 = vmatprep.subr.mxu0 0.0
  %582 = vmatpush1.msra.mxu0 %v487
  %583 = vmatprep.subr.mxu0 0.0
  %584 = vmatpush1.msra.mxu0 %v488
  %585 = vmatprep.subr.mxu0 0.0
  %586 = vmatpush1.msra.mxu0 %v489
  %587 = vmatprep.subr.mxu0 0.0
  %588 = vmatpush1.msra.mxu0 %v490
  %589 = vmatprep.subr.mxu0 0.0
  %590 = vmatpush1.msra.mxu0 %v491
  %591 = vmatprep.subr.mxu0 0.0
  %592 = vmatpush1.msra.mxu0 %v492
  %593 = vmatprep.subr.mxu0 0.0
  %594 = vmatpush1.msra.mxu0 %v493
  %595 = vmatprep.subr.mxu0 0.0
  %596 = vmatpush1.msra.mxu0 %v494
  %597 = vmatprep.subr.mxu0 0.0
  %598 = vmatpush1.msra.mxu0 %v495
  %599 = vmatprep.subr.mxu0 0.0
  %600 = vmatpush1.msra.mxu0 0.0
  %601 = vmatprep.subr.mxu0 0.0
  %602 = vmatpush1.msra.mxu0 0.0
  %603 = vmatprep.subr.mxu0 0.0
  %604 = vmatpush1.msra.mxu0 0.0
  %605 = vmatprep.subr.mxu0 0.0
  %606 = vmatpush1.msra.mxu0 0.0
  %607 = vmatprep.subr.mxu0 0.0
  %608 = vmatpush1.msra.mxu0 0.0
  %609 = vmatprep.subr.mxu0 0.0
  %610 = vmatpush1.msra.mxu0 0.0
  %611 = vmatprep.subr.mxu0 0.0
  %612 = vmatpush1.msra.mxu0 0.0
  %613 = vmatprep.subr.mxu0 0.0
  %614 = vmatpush1.msra.mxu0 0.0
  %615 = vmatprep.subr.mxu0 0.0
  %616 = vmatpush1.msra.mxu0 0.0
  %617 = vmatprep.subr.mxu0 0.0
  %618 = vmatpush1.msra.mxu0 0.0
  %619 = vmatprep.subr.mxu0 0.0
  %620 = vmatpush1.msra.mxu0 0.0
  %621 = vmatprep.subr.mxu0 0.0
  %622 = vmatpush1.msra.mxu0 0.0
  %623 = vmatprep.subr.mxu0 0.0
  %624 = vmatpush1.msra.mxu0 0.0
  %625 = vmatprep.subr.mxu0 0.0
  %626 = vmatpush1.msra.mxu0 0.0
  %627 = vmatprep.subr.mxu0 0.0
  %628 = vmatpush1.msra.mxu0 0.0
  %629 = vmatprep.subr.mxu0 0.0
  %630 = vmatpush1.msra.mxu0 0.0
  %631 = vmatprep.mubr.f32.mxu0 0.0
  %632 = vmatmul.mubr.f32.gmra.mrb[0].mxu0 %v479
  %v633 = vpop.f32.mrb[0].mxu0
  %v634 = vadd.f32 0.0, %v633
  %v635 = vpop.f32.mrb[0].mxu0
  %636 = vdwg.mxu0
  %v637 = vmul.f32 %v634, 0.001953125
  %v638 = vmul.f32 %v566, %v566
  %v639 = vsub.f32 %v637, %v638
  %v640 = vadd.f32 %v639, 1e-05
  %v641 = vrsqrt.pop %v640
  %v642 = vlaneseq
  %v643 = vshrl.u32 %v642, 7
  %v644 = vsub.s32 0, %v643
  %v645 = vrot.slane %v566, %v644
  %v646 = vsub.f32 %v401, %v645
  %v647 = vsub.f32 %v404, %v645
  %v648 = vsub.f32 %v409, %v645
  %v649 = vsub.f32 %v412, %v645
  %v650 = vsub.f32 %v417, %v645
  %v651 = vmul.f32 %v641, %v47
  %v652 = vlaneseq
  %v653 = vshrl.u32 %v652, 7
  %v654 = vsub.s32 0, %v653
  %v655 = vrot.slane %v651, %v654
  %v656 = vmul.f32 %v646, %v655
  %v657 = vmul.f32 %v647, %v655
  %v658 = vmul.f32 %v648, %v655
  %v659 = vmul.f32 %v649, %v655
  %v660 = vmul.f32 %v650, %v655
  %v661 = vlaneseq
  %v662 = vshrl.u32 %v661, 7
  %v663 = vsub.s32 0, %v662
  %v664 = vrot.slane %v48, %v663
  %v665 = vadd.f32 %v656, %v664
  %v666 = vadd.f32 %v657, %v664
  %v667 = vadd.f32 %v658, %v664
  %v668 = vadd.f32 %v659, %v664
  %v669 = vadd.f32 %v660, %v664
  %vm670 = vcmp.ge.f32.partialorder %v665, 0.0
  %vm671 = vcmp.ge.f32.partialorder %v666, 0.0
  %vm672 = vcmp.ge.f32.partialorder %v667, 0.0
  %vm673 = vcmp.ge.f32.partialorder %v668, 0.0
  %vm674 = vcmp.ge.f32.partialorder %v669, 0.0
  %v675 = vmul.f32 %v665, 0.01
  %v676 = vmul.f32 %v666, 0.01
  %v677 = vmul.f32 %v667, 0.01
  %v678 = vmul.f32 %v668, 0.01
  %v679 = vmul.f32 %v669, 0.01
  %v680 = vsel %vm670, %v665, %v675
  %v681 = vsel %vm671, %v666, %v676
  %v682 = vsel %vm672, %v667, %v677
  %v683 = vsel %vm673, %v668, %v678
  %v684 = vsel %vm674, %v669, %v679
  %v685 = vmul.f32 %v680, %v425
  %v686 = vmul.f32 %v681, %v430
  %v687 = vmul.f32 %v682, %v435
  %v688 = vmul.f32 %v683, %v440
  %v689 = vmul.f32 %v684, %v445
  %690 = vst [vmem:[#allocation2] sm:$0xff] %v685
  %691 = vst [vmem:[#allocation2 + $0x8] sm:$0xff] %v686
  %692 = vst [vmem:[#allocation2 + $0x10] sm:$0xff] %v687
  %693 = vst [vmem:[#allocation2 + $0x18] sm:$0xff] %v688
  %694 = vst [vmem:[#allocation2 + $0x20] sm:$0xf] %v689
  %v695 = vld [vmem:[#allocation2] sm:$0xff]
  %v696 = vld [vmem:[#allocation2 + $0x8] sm:$0xff]
  %v697 = vld [vmem:[#allocation2 + $0x10] sm:$0xff]
  %v698 = vld [vmem:[#allocation2 + $0x18] sm:$0xff]
  %v699 = vld [vmem:[#allocation2 + $0x20] sm:$0x3]
  %v700 = vld [vmem:[#allocation2 + $0x1] sm:$0xff]
  %v701 = vld [vmem:[#allocation2 + $0x9] sm:$0xff]
  %v702 = vld [vmem:[#allocation2 + $0x11] sm:$0xff]
  %v703 = vld [vmem:[#allocation2 + $0x19] sm:$0xff]
  %v704 = vld [vmem:[#allocation2 + $0x21] sm:$0x3]
  %v705 = vld [vmem:[#allocation2 + $0x2] sm:$0xff]
  %v706 = vld [vmem:[#allocation2 + $0xa] sm:$0xff]
  %v707 = vld [vmem:[#allocation2 + $0x12] sm:$0xff]
  %v708 = vld [vmem:[#allocation2 + $0x1a] sm:$0xff]
  %v709 = vld [vmem:[#allocation2 + $0x22] sm:$0x3]
  %v710 = vpack.c.bf16 %v696, %v695
  %v711 = vpack.c.bf16 %v701, %v700
  %v712 = vpack.c.bf16 %v706, %v705
  %v713 = vpack.c.bf16 %v698, %v697
  %v714 = vpack.c.bf16 %v703, %v702
  %v715 = vpack.c.bf16 %v708, %v707
  %v716 = vpack.c.bf16 %v699, %v699
  %v717 = vpack.c.bf16 %v704, %v704
  %v718 = vpack.c.bf16 %v709, %v709
  %v719 = vld [vmem:[%s5] sm:$0xf]
  %v720 = vld [vmem:[%s5 + $0x4] sm:$0xf]
  %v721 = vld [vmem:[%s5 + $0x8] sm:$0xf]
  %v722 = vld [vmem:[%s5 + $0xc] sm:$0xf]
  %v723 = vld [vmem:[%s5 + $0x10] sm:$0xf]
  %v724 = vld [vmem:[%s5 + $0x14] sm:$0xf]
  %v725 = vld [vmem:[%s5 + $0x18] sm:$0xf]
  %v726 = vld [vmem:[%s5 + $0x1c] sm:$0xf]
  %v727 = vld [vmem:[%s5 + $0x20] sm:$0xf]
  %v728 = vld [vmem:[%s5 + $0x24] sm:$0xf]
  %v729 = vld [vmem:[%s5 + $0x28] sm:$0xf]
  %v730 = vld [vmem:[%s5 + $0x2c] sm:$0xf]
  %v731 = vld [vmem:[%s5 + $0x30] sm:$0xf]
  %v732 = vld [vmem:[%s5 + $0x34] sm:$0xf]
  %v733 = vld [vmem:[%s5 + $0x38] sm:$0xf]
  %v734 = vld [vmem:[%s5 + $0x3c] sm:$0xf]
  %v735 = vld [vmem:[%s5 + $0x40] sm:$0xf]
  %v736 = vld [vmem:[%s5 + $0x44] sm:$0xf]
  %v737 = vld [vmem:[%s5 + $0x48] sm:$0xf]
  %v738 = vld [vmem:[%s5 + $0x4c] sm:$0xf]
  %v739 = vld [vmem:[%s5 + $0x50] sm:$0xf]
  %v740 = vld [vmem:[%s5 + $0x54] sm:$0xf]
  %v741 = vld [vmem:[%s5 + $0x58] sm:$0xf]
  %v742 = vld [vmem:[%s5 + $0x5c] sm:$0xf]
  %v743 = vld [vmem:[%s5 + $0x60] sm:$0xf]
  %v744 = vld [vmem:[%s5 + $0x64] sm:$0xf]
  %v745 = vld [vmem:[%s5 + $0x68] sm:$0xf]
  %v746 = vld [vmem:[%s5 + $0x6c] sm:$0xf]
  %v747 = vld [vmem:[%s5 + $0x70] sm:$0xf]
  %v748 = vld [vmem:[%s5 + $0x74] sm:$0xf]
  %v749 = vld [vmem:[%s5 + $0x78] sm:$0xf]
  %v750 = vld [vmem:[%s5 + $0x7c] sm:$0xf]
  %v751 = vld [vmem:[%s5 + $0x80] sm:$0xf]
  %v752 = vld [vmem:[%s5 + $0x84] sm:$0xf]
  %v753 = vld [vmem:[%s5 + $0x88] sm:$0xf]
  %v754 = vld [vmem:[%s5 + $0x8c] sm:$0xf]
  %v755 = vld [vmem:[%s5 + $0x90] sm:$0xf]
  %v756 = vld [vmem:[%s5 + $0x94] sm:$0xf]
  %v757 = vld [vmem:[%s5 + $0x98] sm:$0xf]
  %v758 = vld [vmem:[%s5 + $0x9c] sm:$0xf]
  %v759 = vld [vmem:[%s5 + $0xa0] sm:$0xf]
  %v760 = vld [vmem:[%s5 + $0xa4] sm:$0xf]
  %v761 = vld [vmem:[%s5 + $0xa8] sm:$0xf]
  %v762 = vld [vmem:[%s5 + $0xac] sm:$0xf]
  %v763 = vld [vmem:[%s5 + $0xb0] sm:$0xf]
  %v764 = vld [vmem:[%s5 + $0xb4] sm:$0xf]
  %v765 = vld [vmem:[%s5 + $0xb8] sm:$0xf]
  %v766 = vld [vmem:[%s5 + $0xbc] sm:$0xf]
  %v767 = vlaneseq
  %v768 = vshrl.u32 %v767, 7
  %v769 = vsub.s32 0, %v768
  %v770 = vrot.slane %v46, %v769
  %v819 = vunpack.c.l.b16 %v719
  %v820 = vunpack.c.l.b16 %v720
  %v821 = vunpack.c.l.b16 %v721
  %v822 = vunpack.c.l.b16 %v722
  %v823 = vunpack.c.l.b16 %v723
  %v824 = vunpack.c.l.b16 %v724
  %v825 = vunpack.c.l.b16 %v725
  %v826 = vunpack.c.l.b16 %v726
  %v827 = vunpack.c.l.b16 %v727
  %v828 = vunpack.c.l.b16 %v728
  %v829 = vunpack.c.l.b16 %v729
  %v830 = vunpack.c.l.b16 %v730
  %v831 = vunpack.c.l.b16 %v731
  %v832 = vunpack.c.l.b16 %v732
  %v833 = vunpack.c.l.b16 %v733
  %v834 = vunpack.c.l.b16 %v734
  %v835 = vunpack.c.l.b16 %v735
  %v836 = vunpack.c.l.b16 %v736
  %v837 = vunpack.c.l.b16 %v737
  %v838 = vunpack.c.l.b16 %v738
  %v839 = vunpack.c.l.b16 %v739
  %v840 = vunpack.c.l.b16 %v740
  %v841 = vunpack.c.l.b16 %v741
  %v842 = vunpack.c.l.b16 %v742
  %v843 = vunpack.c.l.b16 %v743
  %v844 = vunpack.c.l.b16 %v744
  %v845 = vunpack.c.l.b16 %v745
  %v846 = vunpack.c.l.b16 %v746
  %v847 = vunpack.c.l.b16 %v747
  %v848 = vunpack.c.l.b16 %v748
  %v849 = vunpack.c.l.b16 %v749
  %v850 = vunpack.c.l.b16 %v750
  %v851 = vunpack.c.l.b16 %v751
  %v852 = vunpack.c.l.b16 %v752
  %v853 = vunpack.c.l.b16 %v753
  %v854 = vunpack.c.l.b16 %v754
  %v855 = vunpack.c.l.b16 %v755
  %v856 = vunpack.c.l.b16 %v756
  %v857 = vunpack.c.l.b16 %v757
  %v858 = vunpack.c.l.b16 %v758
  %v859 = vunpack.c.l.b16 %v759
  %v860 = vunpack.c.l.b16 %v760
  %v861 = vunpack.c.l.b16 %v761
  %v862 = vunpack.c.l.b16 %v762
  %v863 = vunpack.c.l.b16 %v763
  %v864 = vunpack.c.l.b16 %v764
  %v865 = vunpack.c.l.b16 %v765
  %v866 = vunpack.c.l.b16 %v766
  %v867 = vpack.c.b16 %v820, %v819
  %v868 = vpack.c.b16 %v822, %v821
  %v869 = vpack.c.b16 %v824, %v823
  %v870 = vpack.c.b16 %v826, %v825
  %v871 = vpack.c.b16 %v828, %v827
  %v872 = vpack.c.b16 %v830, %v829
  %v873 = vpack.c.b16 %v832, %v831
  %v874 = vpack.c.b16 %v834, %v833
  %v875 = vpack.c.b16 %v836, %v835
  %v876 = vpack.c.b16 %v838, %v837
  %v877 = vpack.c.b16 %v840, %v839
  %v878 = vpack.c.b16 %v842, %v841
  %v879 = vpack.c.b16 %v844, %v843
  %v880 = vpack.c.b16 %v846, %v845
  %v881 = vpack.c.b16 %v848, %v847
  %v882 = vpack.c.b16 %v850, %v849
  %v883 = vpack.c.b16 %v852, %v851
  %v884 = vpack.c.b16 %v854, %v853
  %v885 = vpack.c.b16 %v856, %v855
  %v886 = vpack.c.b16 %v858, %v857
  %v887 = vpack.c.b16 %v860, %v859
  %v888 = vpack.c.b16 %v862, %v861
  %v889 = vpack.c.b16 %v864, %v863
  %v890 = vpack.c.b16 %v866, %v865
  %915 = vmatprep.subr.bf16.mxu0 0
  %916 = vmatpush1.bf16.msra.mxu0 %v867
  %917 = vmatprep.subr.bf16.mxu0 0
  %918 = vmatpush1.bf16.msra.mxu0 %v868
  %919 = vmatprep.subr.bf16.mxu0 0
  %920 = vmatpush1.bf16.msra.mxu0 %v869
  %921 = vmatprep.subr.bf16.mxu0 0
  %922 = vmatpush1.bf16.msra.mxu0 %v870
  %923 = vmatprep.subr.bf16.mxu0 0
  %924 = vmatpush1.bf16.msra.mxu0 %v871
  %925 = vmatprep.subr.bf16.mxu0 0
  %926 = vmatpush1.bf16.msra.mxu0 %v872
  %927 = vmatprep.subr.bf16.mxu0 0
  %928 = vmatpush1.bf16.msra.mxu0 %v873
  %929 = vmatprep.subr.bf16.mxu0 0
  %930 = vmatpush1.bf16.msra.mxu0 %v874
  %931 = vmatprep.subr.bf16.mxu0 0
  %932 = vmatpush1.bf16.msra.mxu0 %v875
  %933 = vmatprep.subr.bf16.mxu0 0
  %934 = vmatpush1.bf16.msra.mxu0 %v876
  %935 = vmatprep.subr.bf16.mxu0 0
  %936 = vmatpush1.bf16.msra.mxu0 %v877
  %937 = vmatprep.subr.bf16.mxu0 0
  %938 = vmatpush1.bf16.msra.mxu0 %v878
  %939 = vmatprep.subr.bf16.mxu0 0
  %940 = vmatpush1.bf16.msra.mxu0 %v879
  %941 = vmatprep.subr.bf16.mxu0 0
  %942 = vmatpush1.bf16.msra.mxu0 %v880
  %943 = vmatprep.subr.bf16.mxu0 0
  %944 = vmatpush1.bf16.msra.mxu0 %v881
  %945 = vmatprep.subr.bf16.mxu0 0
  %946 = vmatpush1.bf16.msra.mxu0 %v882
  %947 = vmatprep.mubr.bf16.mxu0 %v711
  %948 = vmatmul.mubr.bf16.gmra.mrb[0].mxu0 %v710
  %v949 = vpop.f32.mrb[0].mxu0
  %v950 = vadd.f32 %v770, %v949
  %v951 = vpop.f32.mrb[0].mxu0
  %v952 = vpop.f32.mrb[0].mxu0
  %v953 = vadd.f32 %v770, %v952
  %v954 = vpop.f32.mrb[0].mxu0
  %955 = vmatprep.mubr.bf16.mxu0 %v714
  %956 = vmatmul.mubr.bf16.gmra.mrb[0].mxu0 %v713
  %v957 = vpop.f32.mrb[0].mxu0
  %v958 = vadd.f32 %v770, %v957
  %v959 = vpop.f32.mrb[0].mxu0
  %v960 = vpop.f32.mrb[0].mxu0
  %v961 = vadd.f32 %v770, %v960
  %v962 = vpop.f32.mrb[0].mxu0
  %963 = vmatprep.mubr.bf16.mxu0 %v717
  %964 = vmatmul.mubr.bf16.gmra.mrb[0].mxu0 %v716
  %v965 = vpop.f32.mrb[0].mxu0
  %v966 = vadd.f32 %v770, %v965
  %v967 = vpop.f32.mrb[0].mxu0
  %v968 = vpop.f32.mrb[0].mxu0
  %v969 = vpop.f32.mrb[0].mxu0
  %970 = vdwg.mxu0
  %971 = vmatprep.subr.bf16.mxu0 0
  %972 = vmatpush1.bf16.msra.mxu0 %v883
  %973 = vmatprep.subr.bf16.mxu0 0
  %974 = vmatpush1.bf16.msra.mxu0 %v884
  %975 = vmatprep.subr.bf16.mxu0 0
  %976 = vmatpush1.bf16.msra.mxu0 %v885
  %977 = vmatprep.subr.bf16.mxu0 0
  %978 = vmatpush1.bf16.msra.mxu0 %v886
  %979 = vmatprep.subr.bf16.mxu0 0
  %980 = vmatpush1.bf16.msra.mxu0 %v887
  %981 = vmatprep.subr.bf16.mxu0 0
  %982 = vmatpush1.bf16.msra.mxu0 %v888
  %983 = vmatprep.subr.bf16.mxu0 0
  %984 = vmatpush1.bf16.msra.mxu0 %v889
  %985 = vmatprep.subr.bf16.mxu0 0
  %986 = vmatpush1.bf16.msra.mxu0 %v890
  %987 = vmatprep.subr.bf16.mxu0 0
  %988 = vmatpush1.bf16.msra.mxu0 0
  %989 = vmatprep.subr.bf16.mxu0 0
  %990 = vmatpush1.bf16.msra.mxu0 0
  %991 = vmatprep.subr.bf16.mxu0 0
  %992 = vmatpush1.bf16.msra.mxu0 0
  %993 = vmatprep.subr.bf16.mxu0 0
  %994 = vmatpush1.bf16.msra.mxu0 0
  %995 = vmatprep.subr.bf16.mxu0 0
  %996 = vmatpush1.bf16.msra.mxu0 0
  %997 = vmatprep.subr.bf16.mxu0 0
  %998 = vmatpush1.bf16.msra.mxu0 0
  %999 = vmatprep.subr.bf16.mxu0 0
  %1000 = vmatpush1.bf16.msra.mxu0 0
  %1001 = vmatprep.subr.bf16.mxu0 0
  %1002 = vmatpush1.bf16.msra.mxu0 0
  %1003 = vmatprep.mubr.bf16.mxu0 0
  %1004 = vmatmul.mubr.bf16.gmra.mrb[0].mxu0 %v712
  %v1005 = vpop.f32.mrb[0].mxu0
  %v1006 = vadd.f32 %v950, %v1005
  %v1007 = vpop.f32.mrb[0].mxu0
  %v1008 = vpop.f32.mrb[0].mxu0
  %v1009 = vadd.f32 %v953, %v1008
  %v1010 = vpop.f32.mrb[0].mxu0
  %1011 = vmatprep.mubr.bf16.mxu0 0
  %1012 = vmatmul.mubr.bf16.gmra.mrb[0].mxu0 %v715
  %v1013 = vpop.f32.mrb[0].mxu0
  %v1014 = vadd.f32 %v958, %v1013
  %v1015 = vpop.f32.mrb[0].mxu0
  %v1016 = vpop.f32.mrb[0].mxu0
  %v1017 = vadd.f32 %v961, %v1016
  %v1018 = vpop.f32.mrb[0].mxu0
  %1019 = vmatprep.mubr.bf16.mxu0 0
  %1020 = vmatmul.mubr.bf16.gmra.mrb[0].mxu0 %v718
  %v1021 = vpop.f32.mrb[0].mxu0
  %v1022 = vadd.f32 %v966, %v1021
  %v1023 = vpop.f32.mrb[0].mxu0
  %v1024 = vpop.f32.mrb[0].mxu0
  %v1025 = vpop.f32.mrb[0].mxu0
  %1026 = vdwg.mxu0
  %vm1027 = vcmp.ge.f32.partialorder %v1006, 0.0
  %vm1028 = vcmp.ge.f32.partialorder %v1009, 0.0
  %vm1029 = vcmp.ge.f32.partialorder %v1014, 0.0
  %vm1030 = vcmp.ge.f32.partialorder %v1017, 0.0
  %vm1031 = vcmp.ge.f32.partialorder %v1022, 0.0
  %v1032 = vmul.f32 %v1006, 0.01
  %v1033 = vmul.f32 %v1009, 0.01
  %v1034 = vmul.f32 %v1014, 0.01
  %v1035 = vmul.f32 %v1017, 0.01
  %v1036 = vmul.f32 %v1022, 0.01
  %v1037 = vsel %vm1027, %v1006, %v1032
  %v1038 = vsel %vm1028, %v1009, %v1033
  %v1039 = vsel %vm1029, %v1014, %v1034
  %v1040 = vsel %vm1030, %v1017, %v1035
  %v1041 = vsel %vm1031, %v1022, %v1036
  %1043 = vset.pattern.permute.xlu0 0
  %1044 = vperm.xlu0 %1043, %v56
  %v1045 = vpop.permute.xlu0 %1044
  %1048 = vset.pattern.permute.xlu0 0
  %1049 = vperm.xlu0 %1048, %v57
  %v1050 = vpop.permute.xlu0 %1049
  %1053 = vset.pattern.permute.xlu0 0
  %1054 = vperm.xlu0 %1053, %v58
  %v1055 = vpop.permute.xlu0 %1054
  %1058 = vset.pattern.permute.xlu0 0
  %1059 = vperm.xlu0 %1058, %v59
  %v1060 = vpop.permute.xlu0 %1059
  %1063 = vset.pattern.permute.xlu0 0
  %1064 = vperm.xlu0 %1063, %v60
  %v1065 = vpop.permute.xlu0 %1064
  %v1067 = vmul.f32 %v1037, %v1045
  %v1068 = vmul.f32 %v1038, %v1050
  %v1069 = vmul.f32 %v1039, %v1055
  %v1070 = vmul.f32 %v1040, %v1060
  %v1071 = vmul.f32 %v1041, %v1065
  %v1072 = vadd.f32 %v1067, %v1068
  %v1073 = vadd.f32 %v1072, %v1069
  %v1074 = vadd.f32 %v1073, %v1070
  %vm1075 = vcmask 1041408
  %v1076 = vsel %vm1075, %v1071, 0.0
  %v1077 = vadd.f32 %v1074, %v1076
  %v1078 = vrot.slane %v1077, 4
  %v1079 = vadd.f32 %v1077, %v1078
  %v1080 = vrot.slane %v1079, 2
  %v1081 = vadd.f32 %v1079, %v1080
  %v1082 = vrot.slane %v1081, 1
  %v1083 = vadd.f32 %v1081, %v1082
  %v1084 = vmul.f32 %v1067, %v1067
  %v1085 = vmul.f32 %v1068, %v1068
  %v1086 = vmul.f32 %v1069, %v1069
  %v1087 = vmul.f32 %v1070, %v1070
  %v1088 = vmul.f32 %v1071, %v1071
  %v1089 = vadd.f32 %v1084, %v1085
  %v1090 = vadd.f32 %v1089, %v1086
  %v1091 = vadd.f32 %v1090, %v1087
  %v1092 = vsel %vm1075, %v1088, 0.0
  %v1093 = vadd.f32 %v1091, %v1092
  %v1094 = vrot.slane %v1093, 4
  %v1095 = vadd.f32 %v1093, %v1094
  %v1096 = vrot.slane %v1095, 2
  %v1097 = vadd.f32 %v1095, %v1096
  %v1098 = vrot.slane %v1097, 1
  %v1099 = vadd.f32 %v1097, %v1098
  %v1100 = vld [vmem:[%s10] sm:$0xff]
  %v1101 = vld [vmem:[%s10 + $0x8] sm:$0xff]
  %v1102 = vld [vmem:[%s10 + $0x10] sm:$0xff]
  %v1103 = vld [vmem:[%s10 + $0x18] sm:$0xff]
  %v1104 = vld [vmem:[%s10 + $0x20] sm:$0xff]
  %v1105 = vld [vmem:[%s10 + $0x28] sm:$0xff]
  %v1106 = vld [vmem:[%s10 + $0x30] sm:$0xff]
  %v1107 = vld [vmem:[%s10 + $0x38] sm:$0xff]
  %v1108 = vld [vmem:[%s10 + $0x40] sm:$0xff]
  %v1109 = vld [vmem:[%s10 + $0x48] sm:$0xff]
  %v1110 = vld [vmem:[%s10 + $0x50] sm:$0xff]
  %v1111 = vld [vmem:[%s10 + $0x58] sm:$0xff]
  %v1112 = vld [vmem:[%s10 + $0x60] sm:$0xff]
  %v1113 = vld [vmem:[%s10 + $0x68] sm:$0xff]
  %v1114 = vld [vmem:[%s10 + $0x70] sm:$0xff]
  %v1115 = vld [vmem:[%s10 + $0x78] sm:$0xff]
  %1116 = vmatprep.subr.mxu0 0.0
  %1117 = vmatpush1.msra.mxu0 %v1100
  %1118 = vmatprep.subr.mxu0 0.0
  %1119 = vmatpush1.msra.mxu0 %v1101
  %1120 = vmatprep.subr.mxu0 0.0
  %1121 = vmatpush1.msra.mxu0 %v1102
  %1122 = vmatprep.subr.mxu0 0.0
  %1123 = vmatpush1.msra.mxu0 %v1103
  %1124 = vmatprep.subr.mxu0 0.0
  %1125 = vmatpush1.msra.mxu0 %v1104
  %1126 = vmatprep.subr.mxu0 0.0
  %1127 = vmatpush1.msra.mxu0 %v1105
  %1128 = vmatprep.subr.mxu0 0.0
  %1129 = vmatpush1.msra.mxu0 %v1106
  %1130 = vmatprep.subr.mxu0 0.0
  %1131 = vmatpush1.msra.mxu0 %v1107
  %1132 = vmatprep.subr.mxu0 0.0
  %1133 = vmatpush1.msra.mxu0 %v1108
  %1134 = vmatprep.subr.mxu0 0.0
  %1135 = vmatpush1.msra.mxu0 %v1109
  %1136 = vmatprep.subr.mxu0 0.0
  %1137 = vmatpush1.msra.mxu0 %v1110
  %1138 = vmatprep.subr.mxu0 0.0
  %1139 = vmatpush1.msra.mxu0 %v1111
  %1140 = vmatprep.subr.mxu0 0.0
  %1141 = vmatpush1.msra.mxu0 %v1112
  %1142 = vmatprep.subr.mxu0 0.0
  %1143 = vmatpush1.msra.mxu0 %v1113
  %1144 = vmatprep.subr.mxu0 0.0
  %1145 = vmatpush1.msra.mxu0 %v1114
  %1146 = vmatprep.subr.mxu0 0.0
  %1147 = vmatpush1.msra.mxu0 %v1115
  %1148 = vmatprep.subr.mxu0 0.0
  %1149 = vmatpush1.msra.mxu0 0.0
  %1150 = vmatprep.subr.mxu0 0.0
  %1151 = vmatpush1.msra.mxu0 0.0
  %1152 = vmatprep.subr.mxu0 0.0
  %1153 = vmatpush1.msra.mxu0 0.0
  %1154 = vmatprep.subr.mxu0 0.0
  %1155 = vmatpush1.msra.mxu0 0.0
  %1156 = vmatprep.subr.mxu0 0.0
  %1157 = vmatpush1.msra.mxu0 0.0
  %1158 = vmatprep.subr.mxu0 0.0
  %1159 = vmatpush1.msra.mxu0 0.0
  %1160 = vmatprep.subr.mxu0 0.0
  %1161 = vmatpush1.msra.mxu0 0.0
  %1162 = vmatprep.subr.mxu0 0.0
  %1163 = vmatpush1.msra.mxu0 0.0
  %1164 = vmatprep.subr.mxu0 0.0
  %1165 = vmatpush1.msra.mxu0 0.0
  %1166 = vmatprep.subr.mxu0 0.0
  %1167 = vmatpush1.msra.mxu0 0.0
  %1168 = vmatprep.subr.mxu0 0.0
  %1169 = vmatpush1.msra.mxu0 0.0
  %1170 = vmatprep.subr.mxu0 0.0
  %1171 = vmatpush1.msra.mxu0 0.0
  %1172 = vmatprep.subr.mxu0 0.0
  %1173 = vmatpush1.msra.mxu0 0.0
  %1174 = vmatprep.subr.mxu0 0.0
  %1175 = vmatpush1.msra.mxu0 0.0
  %1176 = vmatprep.subr.mxu0 0.0
  %1177 = vmatpush1.msra.mxu0 0.0
  %1178 = vmatprep.subr.mxu0 0.0
  %1179 = vmatpush1.msra.mxu0 0.0
  %1180 = vmatprep.mubr.f32.mxu0 0.0
  %1181 = vmatmul.mubr.f32.gmra.mrb[0].mxu0 %v1083
  %v1182 = vpop.f32.mrb[0].mxu0
  %v1183 = vadd.f32 0.0, %v1182
  %v1184 = vpop.f32.mrb[0].mxu0
  %1185 = vdwg.mxu0
  %v1186 = vmul.f32 %v1183, 0.001953125
  %1187 = vmatprep.subr.mxu0 0.0
  %1188 = vmatpush1.msra.mxu0 %v1100
  %1189 = vmatprep.subr.mxu0 0.0
  %1190 = vmatpush1.msra.mxu0 %v1101
  %1191 = vmatprep.subr.mxu0 0.0
  %1192 = vmatpush1.msra.mxu0 %v1102
  %1193 = vmatprep.subr.mxu0 0.0
  %1194 = vmatpush1.msra.mxu0 %v1103
  %1195 = vmatprep.subr.mxu0 0.0
  %1196 = vmatpush1.msra.mxu0 %v1104
  %1197 = vmatprep.subr.mxu0 0.0
  %1198 = vmatpush1.msra.mxu0 %v1105
  %1199 = vmatprep.subr.mxu0 0.0
  %1200 = vmatpush1.msra.mxu0 %v1106
  %1201 = vmatprep.subr.mxu0 0.0
  %1202 = vmatpush1.msra.mxu0 %v1107
  %1203 = vmatprep.subr.mxu0 0.0
  %1204 = vmatpush1.msra.mxu0 %v1108
  %1205 = vmatprep.subr.mxu0 0.0
  %1206 = vmatpush1.msra.mxu0 %v1109
  %1207 = vmatprep.subr.mxu0 0.0
  %1208 = vmatpush1.msra.mxu0 %v1110
  %1209 = vmatprep.subr.mxu0 0.0
  %1210 = vmatpush1.msra.mxu0 %v1111
  %1211 = vmatprep.subr.mxu0 0.0
  %1212 = vmatpush1.msra.mxu0 %v1112
  %1213 = vmatprep.subr.mxu0 0.0
  %1214 = vmatpush1.msra.mxu0 %v1113
  %1215 = vmatprep.subr.mxu0 0.0
  %1216 = vmatpush1.msra.mxu0 %v1114
  %1217 = vmatprep.subr.mxu0 0.0
  %1218 = vmatpush1.msra.mxu0 %v1115
  %1219 = vmatprep.subr.mxu0 0.0
  %1220 = vmatpush1.msra.mxu0 0.0
  %1221 = vmatprep.subr.mxu0 0.0
  %1222 = vmatpush1.msra.mxu0 0.0
  %1223 = vmatprep.subr.mxu0 0.0
  %1224 = vmatpush1.msra.mxu0 0.0
  %1225 = vmatprep.subr.mxu0 0.0
  %1226 = vmatpush1.msra.mxu0 0.0
  %1227 = vmatprep.subr.mxu0 0.0
  %1228 = vmatpush1.msra.mxu0 0.0
  %1229 = vmatprep.subr.mxu0 0.0
  %1230 = vmatpush1.msra.mxu0 0.0
  %1231 = vmatprep.subr.mxu0 0.0
  %1232 = vmatpush1.msra.mxu0 0.0
  %1233 = vmatprep.subr.mxu0 0.0
  %1234 = vmatpush1.msra.mxu0 0.0
  %1235 = vmatprep.subr.mxu0 0.0
  %1236 = vmatpush1.msra.mxu0 0.0
  %1237 = vmatprep.subr.mxu0 0.0
  %1238 = vmatpush1.msra.mxu0 0.0
  %1239 = vmatprep.subr.mxu0 0.0
  %1240 = vmatpush1.msra.mxu0 0.0
  %1241 = vmatprep.subr.mxu0 0.0
  %1242 = vmatpush1.msra.mxu0 0.0
  %1243 = vmatprep.subr.mxu0 0.0
  %1244 = vmatpush1.msra.mxu0 0.0
  %1245 = vmatprep.subr.mxu0 0.0
  %1246 = vmatpush1.msra.mxu0 0.0
  %1247 = vmatprep.subr.mxu0 0.0
  %1248 = vmatpush1.msra.mxu0 0.0
  %1249 = vmatprep.subr.mxu0 0.0
  %1250 = vmatpush1.msra.mxu0 0.0
  %1251 = vmatprep.mubr.f32.mxu0 0.0
  %1252 = vmatmul.mubr.f32.gmra.mrb[0].mxu0 %v1099
  %v1253 = vpop.f32.mrb[0].mxu0
  %v1254 = vadd.f32 0.0, %v1253
  %v1255 = vpop.f32.mrb[0].mxu0
  %1256 = vdwg.mxu0
  %v1257 = vmul.f32 %v1254, 0.001953125
  %v1258 = vmul.f32 %v1186, %v1186
  %v1259 = vsub.f32 %v1257, %v1258
  %v1260 = vadd.f32 %v1259, 1e-05
  %v1261 = vrsqrt.pop %v1260
  %v1262 = vlaneseq
  %v1263 = vshrl.u32 %v1262, 7
  %v1264 = vsub.s32 0, %v1263
  %v1265 = vrot.slane %v1186, %v1264
  %v1266 = vsub.f32 %v1037, %v1265
  %v1267 = vsub.f32 %v1038, %v1265
  %v1268 = vsub.f32 %v1039, %v1265
  %v1269 = vsub.f32 %v1040, %v1265
  %v1270 = vsub.f32 %v1041, %v1265
  %v1271 = vmul.f32 %v1261, %v49
  %v1272 = vlaneseq
  %v1273 = vshrl.u32 %v1272, 7
  %v1274 = vsub.s32 0, %v1273
  %v1275 = vrot.slane %v1271, %v1274
  %v1276 = vmul.f32 %v1266, %v1275
  %v1277 = vmul.f32 %v1267, %v1275
  %v1278 = vmul.f32 %v1268, %v1275
  %v1279 = vmul.f32 %v1269, %v1275
  %v1280 = vmul.f32 %v1270, %v1275
  %v1281 = vlaneseq
  %v1282 = vshrl.u32 %v1281, 7
  %v1283 = vsub.s32 0, %v1282
  %v1284 = vrot.slane %v50, %v1283
  %v1285 = vadd.f32 %v1276, %v1284
  %v1286 = vadd.f32 %v1277, %v1284
  %v1287 = vadd.f32 %v1278, %v1284
  %v1288 = vadd.f32 %v1279, %v1284
  %v1289 = vadd.f32 %v1280, %v1284
  %v1290 = vld [vmem:[%s12] sm:$0xf]
  %v1291 = vld [vmem:[%s12 + $0x4] sm:$0xf]
  %v1292 = vpack.c.bf16 %v1286, %v1285
  %v1293 = vpack.c.bf16 %v1288, %v1287
  %v1294 = vpack.c.bf16 %v1289, %v1289
  %v1297 = vunpack.c.l.b16 %v1290
  %v1298 = vunpack.c.l.b16 %v1291
  %v1299 = vpack.c.b16 %v1298, %v1297
  %vm1300 = vcmask 277504
  %v1302 = vsel %vm1300, %v1299, 0
  %vm1304 = vcmask 1040384
  %v1306 = vsel %vm1304, %v1294, 0
  %1308 = vmatprep.subr.bf16.mxu0 0
  %1309 = vmatpush1.bf16.msra.mxu0 %v1292
  %1310 = vmatprep.subr.bf16.mxu0 0
  %1311 = vmatpush1.bf16.msra.mxu0 %v1293
  %1312 = vmatprep.subr.bf16.mxu0 0
  %1313 = vmatpush1.bf16.msra.mxu0 %v1306
  %1314 = vmatprep.subr.bf16.mxu0 0
  %1315 = vmatpush1.bf16.msra.mxu0 0
  %1316 = vmatprep.subr.bf16.mxu0 0
  %1317 = vmatpush1.bf16.msra.mxu0 0
  %1318 = vmatprep.subr.bf16.mxu0 0
  %1319 = vmatpush1.bf16.msra.mxu0 0
  %1320 = vmatprep.subr.bf16.mxu0 0
  %1321 = vmatpush1.bf16.msra.mxu0 0
  %1322 = vmatprep.subr.bf16.mxu0 0
  %1323 = vmatpush1.bf16.msra.mxu0 0
  %1324 = vmatprep.subr.bf16.mxu0 0
  %1325 = vmatpush1.bf16.msra.mxu0 0
  %1326 = vmatprep.subr.bf16.mxu0 0
  %1327 = vmatpush1.bf16.msra.mxu0 0
  %1328 = vmatprep.subr.bf16.mxu0 0
  %1329 = vmatpush1.bf16.msra.mxu0 0
  %1330 = vmatprep.subr.bf16.mxu0 0
  %1331 = vmatpush1.bf16.msra.mxu0 0
  %1332 = vmatprep.subr.bf16.mxu0 0
  %1333 = vmatpush1.bf16.msra.mxu0 0
  %1334 = vmatprep.subr.bf16.mxu0 0
  %1335 = vmatpush1.bf16.msra.mxu0 0
  %1336 = vmatprep.subr.bf16.mxu0 0
  %1337 = vmatpush1.bf16.msra.mxu0 0
  %1338 = vmatprep.subr.bf16.mxu0 0
  %1339 = vmatpush1.bf16.msra.mxu0 0
  %1340 = vmatprep.mubr.bf16.mxu0 0
  %1341 = vmatmul.mubr.bf16.gmra.mrb[0].mxu0 %v1302
  %v1342 = vpop.f32.mrb[0].mxu0
  %v1343 = vadd.f32 0.0, %v1342
  %v1344 = vpop.f32.mrb[0].mxu0
  %v1345 = vpop.f32.mrb[0].mxu0
  %v1346 = vadd.f32 0.0, %v1345
  %v1347 = vpop.f32.mrb[0].mxu0
  %1348 = vdwg.mxu0
  %v1349 = vpack.c.bf16 %v1346, %v1343
  %v1350 = vld [vmem:[%s6] sm:$0xf]
  %v1351 = vld [vmem:[%s6 + $0x4] sm:$0xf]
  %v1352 = vld [vmem:[%s6 + $0x8] sm:$0xf]
  %v1353 = vld [vmem:[%s6 + $0xc] sm:$0xf]
  %v1354 = vld [vmem:[%s6 + $0x10] sm:$0xf]
  %v1355 = vld [vmem:[%s6 + $0x14] sm:$0xf]
  %v1356 = vld [vmem:[%s6 + $0x18] sm:$0xf]
  %v1357 = vld [vmem:[%s6 + $0x1c] sm:$0xf]
  %v1358 = vld [vmem:[%s6 + $0x20] sm:$0xf]
  %v1359 = vld [vmem:[%s6 + $0x24] sm:$0xf]
  %v1360 = vld [vmem:[%s6 + $0x28] sm:$0xf]
  %v1361 = vld [vmem:[%s6 + $0x2c] sm:$0xf]
  %v1362 = vld [vmem:[%s6 + $0x30] sm:$0xf]
  %v1363 = vld [vmem:[%s6 + $0x34] sm:$0xf]
  %v1364 = vld [vmem:[%s6 + $0x38] sm:$0xf]
  %v1365 = vld [vmem:[%s6 + $0x3c] sm:$0xf]
  %v1366 = vld [vmem:[%s1] sm:$0xf]
  %v1367 = vld [vmem:[%s1 + $0x4] sm:$0xf]
  %v1368 = vld [vmem:[%s7] sm:$0xf]
  %v1369 = vld [vmem:[%s7 + $0x4] sm:$0xf]
  %v1370 = vld [vmem:[%s7 + $0x8] sm:$0xf]
  %v1371 = vld [vmem:[%s7 + $0xc] sm:$0xf]
  %v1372 = vld [vmem:[%s7 + $0x10] sm:$0xf]
  %v1373 = vld [vmem:[%s7 + $0x14] sm:$0xf]
  %v1374 = vld [vmem:[%s7 + $0x18] sm:$0xf]
  %v1375 = vld [vmem:[%s7 + $0x1c] sm:$0xf]
  %v1376 = vld [vmem:[%s7 + $0x20] sm:$0xf]
  %v1377 = vld [vmem:[%s7 + $0x24] sm:$0xf]
  %v1378 = vld [vmem:[%s7 + $0x28] sm:$0xf]
  %v1379 = vld [vmem:[%s7 + $0x2c] sm:$0xf]
  %v1380 = vld [vmem:[%s7 + $0x30] sm:$0xf]
  %v1381 = vld [vmem:[%s7 + $0x34] sm:$0xf]
  %v1382 = vld [vmem:[%s7 + $0x38] sm:$0xf]
  %v1383 = vld [vmem:[%s7 + $0x3c] sm:$0xf]
  %v1386 = vunpack.c.l.b16 %v1366
  %v1387 = vunpack.c.l.b16 %v1367
  %v1388 = vpack.c.b16 %v1387, %v1386
  %v1406 = vunpack.c.l.b16 %v1368
  %v1407 = vunpack.c.l.b16 %v1369
  %v1408 = vunpack.c.l.b16 %v1370
  %v1409 = vunpack.c.l.b16 %v1371
  %v1410 = vunpack.c.l.b16 %v1372
  %v1411 = vunpack.c.l.b16 %v1373
  %v1412 = vunpack.c.l.b16 %v1374
  %v1413 = vunpack.c.l.b16 %v1375
  %v1414 = vunpack.c.l.b16 %v1376
  %v1415 = vunpack.c.l.b16 %v1377
  %v1416 = vunpack.c.l.b16 %v1378
  %v1417 = vunpack.c.l.b16 %v1379
  %v1418 = vunpack.c.l.b16 %v1380
  %v1419 = vunpack.c.l.b16 %v1381
  %v1420 = vunpack.c.l.b16 %v1382
  %v1421 = vunpack.c.l.b16 %v1383
  %v1422 = vpack.c.b16 %v1407, %v1406
  %v1423 = vpack.c.b16 %v1409, %v1408
  %v1424 = vpack.c.b16 %v1411, %v1410
  %v1425 = vpack.c.b16 %v1413, %v1412
  %v1426 = vpack.c.b16 %v1415, %v1414
  %v1427 = vpack.c.b16 %v1417, %v1416
  %v1428 = vpack.c.b16 %v1419, %v1418
  %v1429 = vpack.c.b16 %v1421, %v1420
  %1438 = vmatprep.subr.bf16.mxu0 0
  %1439 = vmatpush1.bf16.msra.mxu0 %v1422
  %1440 = vmatprep.subr.bf16.mxu0 0
  %1441 = vmatpush1.bf16.msra.mxu0 %v1423
  %1442 = vmatprep.subr.bf16.mxu0 0
  %1443 = vmatpush1.bf16.msra.mxu0 %v1424
  %1444 = vmatprep.subr.bf16.mxu0 0
  %1445 = vmatpush1.bf16.msra.mxu0 %v1425
  %1446 = vmatprep.subr.bf16.mxu0 0
  %1447 = vmatpush1.bf16.msra.mxu0 %v1426
  %1448 = vmatprep.subr.bf16.mxu0 0
  %1449 = vmatpush1.bf16.msra.mxu0 %v1427
  %1450 = vmatprep.subr.bf16.mxu0 0
  %1451 = vmatpush1.bf16.msra.mxu0 %v1428
  %1452 = vmatprep.subr.bf16.mxu0 0
  %1453 = vmatpush1.bf16.msra.mxu0 %v1429
  %1454 = vmatprep.subr.bf16.mxu0 0
  %1455 = vmatpush1.bf16.msra.mxu0 0
  %1456 = vmatprep.subr.bf16.mxu0 0
  %1457 = vmatpush1.bf16.msra.mxu0 0
  %1458 = vmatprep.subr.bf16.mxu0 0
  %1459 = vmatpush1.bf16.msra.mxu0 0
  %1460 = vmatprep.subr.bf16.mxu0 0
  %1461 = vmatpush1.bf16.msra.mxu0 0
  %1462 = vmatprep.subr.bf16.mxu0 0
  %1463 = vmatpush1.bf16.msra.mxu0 0
  %1464 = vmatprep.subr.bf16.mxu0 0
  %1465 = vmatpush1.bf16.msra.mxu0 0
  %1466 = vmatprep.subr.bf16.mxu0 0
  %1467 = vmatpush1.bf16.msra.mxu0 0
  %1468 = vmatprep.subr.bf16.mxu0 0
  %1469 = vmatpush1.bf16.msra.mxu0 0
  %1470 = vmatprep.mubr.bf16.mxu0 0
  %1471 = vmatmul.mubr.bf16.gmra.mrb[0].mxu0 %v1388
  %v1472 = vpop.f32.mrb[0].mxu0
  %v1473 = vadd.f32 0.0, %v1472
  %v1474 = vpop.f32.mrb[0].mxu0
  %v1475 = vpop.f32.mrb[0].mxu0
  %v1476 = vadd.f32 0.0, %v1475
  %v1477 = vpop.f32.mrb[0].mxu0
  %1478 = vdwg.mxu0
  %v1495 = vunpack.c.l.b16 %v1350
  %v1496 = vunpack.c.l.b16 %v1351
  %v1497 = vunpack.c.l.b16 %v1352
  %v1498 = vunpack.c.l.b16 %v1353
  %v1499 = vunpack.c.l.b16 %v1354
  %v1500 = vunpack.c.l.b16 %v1355
  %v1501 = vunpack.c.l.b16 %v1356
  %v1502 = vunpack.c.l.b16 %v1357
  %v1503 = vunpack.c.l.b16 %v1358
  %v1504 = vunpack.c.l.b16 %v1359
  %v1505 = vunpack.c.l.b16 %v1360
  %v1506 = vunpack.c.l.b16 %v1361
  %v1507 = vunpack.c.l.b16 %v1362
  %v1508 = vunpack.c.l.b16 %v1363
  %v1509 = vunpack.c.l.b16 %v1364
  %v1510 = vunpack.c.l.b16 %v1365
  %v1511 = vpack.c.b16 %v1496, %v1495
  %v1512 = vpack.c.b16 %v1498, %v1497
  %v1513 = vpack.c.b16 %v1500, %v1499
  %v1514 = vpack.c.b16 %v1502, %v1501
  %v1515 = vpack.c.b16 %v1504, %v1503
  %v1516 = vpack.c.b16 %v1506, %v1505
  %v1517 = vpack.c.b16 %v1508, %v1507
  %v1518 = vpack.c.b16 %v1510, %v1509
  %1527 = vmatprep.subr.bf16.mxu0 0
  %1528 = vmatpush1.bf16.msra.mxu0 %v1511
  %1529 = vmatprep.subr.bf16.mxu0 0
  %1530 = vmatpush1.bf16.msra.mxu0 %v1512
  %1531 = vmatprep.subr.bf16.mxu0 0
  %1532 = vmatpush1.bf16.msra.mxu0 %v1513
  %1533 = vmatprep.subr.bf16.mxu0 0
  %1534 = vmatpush1.bf16.msra.mxu0 %v1514
  %1535 = vmatprep.subr.bf16.mxu0 0
  %1536 = vmatpush1.bf16.msra.mxu0 %v1515
  %1537 = vmatprep.subr.bf16.mxu0 0
  %1538 = vmatpush1.bf16.msra.mxu0 %v1516
  %1539 = vmatprep.subr.bf16.mxu0 0
  %1540 = vmatpush1.bf16.msra.mxu0 %v1517
  %1541 = vmatprep.subr.bf16.mxu0 0
  %1542 = vmatpush1.bf16.msra.mxu0 %v1518
  %1543 = vmatprep.subr.bf16.mxu0 0
  %1544 = vmatpush1.bf16.msra.mxu0 0
  %1545 = vmatprep.subr.bf16.mxu0 0
  %1546 = vmatpush1.bf16.msra.mxu0 0
  %1547 = vmatprep.subr.bf16.mxu0 0
  %1548 = vmatpush1.bf16.msra.mxu0 0
  %1549 = vmatprep.subr.bf16.mxu0 0
  %1550 = vmatpush1.bf16.msra.mxu0 0
  %1551 = vmatprep.subr.bf16.mxu0 0
  %1552 = vmatpush1.bf16.msra.mxu0 0
  %1553 = vmatprep.subr.bf16.mxu0 0
  %1554 = vmatpush1.bf16.msra.mxu0 0
  %1555 = vmatprep.subr.bf16.mxu0 0
  %1556 = vmatpush1.bf16.msra.mxu0 0
  %1557 = vmatprep.subr.bf16.mxu0 0
  %1558 = vmatpush1.bf16.msra.mxu0 0
  %1559 = vmatprep.mubr.bf16.mxu0 0
  %1560 = vmatmul.mubr.bf16.gmra.mrb[0].mxu0 %v1349
  %v1561 = vpop.f32.mrb[0].mxu0
  %v1562 = vadd.f32 %v1473, %v1561
  %v1563 = vpop.f32.mrb[0].mxu0
  %v1564 = vpop.f32.mrb[0].mxu0
  %v1565 = vadd.f32 %v1476, %v1564
  %v1566 = vpop.f32.mrb[0].mxu0
  %1567 = vdwg.mxu0
  %v1568 = vld [vmem:[%s9] sm:$0x1]
  %v1569 = vlaneseq
  %v1570 = vshrl.u32 %v1569, 7
  %v1571 = vsub.s32 0, %v1570
  %v1572 = vrot.slane %v1568, %v1571
  %v1573 = vadd.f32 %v1562, %v1572
  %v1574 = vadd.f32 %v1565, %v1572
  %v1575 = vld [vmem:[%s9 + $0x1] sm:$0x1]
  %v1576 = vld [vmem:[%s9 + $0x2] sm:$0x1]
  %v1577 = vadd.f32 %v1573, %v1574
  %v1578 = vrot.slane %v1577, 4
  %v1579 = vadd.f32 %v1577, %v1578
  %v1580 = vrot.slane %v1579, 2
  %v1581 = vadd.f32 %v1579, %v1580
  %v1582 = vrot.slane %v1581, 1
  %v1583 = vadd.f32 %v1581, %v1582
  %v1584 = vmul.f32 %v1573, %v1573
  %v1585 = vmul.f32 %v1574, %v1574
  %v1586 = vadd.f32 %v1584, %v1585
  %v1587 = vrot.slane %v1586, 4
  %v1588 = vadd.f32 %v1586, %v1587
  %v1589 = vrot.slane %v1588, 2
  %v1590 = vadd.f32 %v1588, %v1589
  %v1591 = vrot.slane %v1590, 1
  %v1592 = vadd.f32 %v1590, %v1591
  %v1593 = vld [vmem:[%s11] sm:$0xff]
  %v1594 = vld [vmem:[%s11 + $0x8] sm:$0xff]
  %v1595 = vld [vmem:[%s11 + $0x10] sm:$0xff]
  %v1596 = vld [vmem:[%s11 + $0x18] sm:$0xff]
  %v1597 = vld [vmem:[%s11 + $0x20] sm:$0xff]
  %v1598 = vld [vmem:[%s11 + $0x28] sm:$0xff]
  %v1599 = vld [vmem:[%s11 + $0x30] sm:$0xff]
  %v1600 = vld [vmem:[%s11 + $0x38] sm:$0xff]
  %v1601 = vld [vmem:[%s11 + $0x40] sm:$0xff]
  %v1602 = vld [vmem:[%s11 + $0x48] sm:$0xff]
  %v1603 = vld [vmem:[%s11 + $0x50] sm:$0xff]
  %v1604 = vld [vmem:[%s11 + $0x58] sm:$0xff]
  %v1605 = vld [vmem:[%s11 + $0x60] sm:$0xff]
  %v1606 = vld [vmem:[%s11 + $0x68] sm:$0xff]
  %v1607 = vld [vmem:[%s11 + $0x70] sm:$0xff]
  %v1608 = vld [vmem:[%s11 + $0x78] sm:$0xff]
  %1609 = vmatprep.subr.mxu0 0.0
  %1610 = vmatpush1.msra.mxu0 %v1593
  %1611 = vmatprep.subr.mxu0 0.0
  %1612 = vmatpush1.msra.mxu0 %v1594
  %1613 = vmatprep.subr.mxu0 0.0
  %1614 = vmatpush1.msra.mxu0 %v1595
  %1615 = vmatprep.subr.mxu0 0.0
  %1616 = vmatpush1.msra.mxu0 %v1596
  %1617 = vmatprep.subr.mxu0 0.0
  %1618 = vmatpush1.msra.mxu0 %v1597
  %1619 = vmatprep.subr.mxu0 0.0
  %1620 = vmatpush1.msra.mxu0 %v1598
  %1621 = vmatprep.subr.mxu0 0.0
  %1622 = vmatpush1.msra.mxu0 %v1599
  %1623 = vmatprep.subr.mxu0 0.0
  %1624 = vmatpush1.msra.mxu0 %v1600
  %1625 = vmatprep.subr.mxu0 0.0
  %1626 = vmatpush1.msra.mxu0 %v1601
  %1627 = vmatprep.subr.mxu0 0.0
  %1628 = vmatpush1.msra.mxu0 %v1602
  %1629 = vmatprep.subr.mxu0 0.0
  %1630 = vmatpush1.msra.mxu0 %v1603
  %1631 = vmatprep.subr.mxu0 0.0
  %1632 = vmatpush1.msra.mxu0 %v1604
  %1633 = vmatprep.subr.mxu0 0.0
  %1634 = vmatpush1.msra.mxu0 %v1605
  %1635 = vmatprep.subr.mxu0 0.0
  %1636 = vmatpush1.msra.mxu0 %v1606
  %1637 = vmatprep.subr.mxu0 0.0
  %1638 = vmatpush1.msra.mxu0 %v1607
  %1639 = vmatprep.subr.mxu0 0.0
  %1640 = vmatpush1.msra.mxu0 %v1608
  %1641 = vmatprep.subr.mxu0 0.0
  %1642 = vmatpush1.msra.mxu0 0.0
  %1643 = vmatprep.subr.mxu0 0.0
  %1644 = vmatpush1.msra.mxu0 0.0
  %1645 = vmatprep.subr.mxu0 0.0
  %1646 = vmatpush1.msra.mxu0 0.0
  %1647 = vmatprep.subr.mxu0 0.0
  %1648 = vmatpush1.msra.mxu0 0.0
  %1649 = vmatprep.subr.mxu0 0.0
  %1650 = vmatpush1.msra.mxu0 0.0
  %1651 = vmatprep.subr.mxu0 0.0
  %1652 = vmatpush1.msra.mxu0 0.0
  %1653 = vmatprep.subr.mxu0 0.0
  %1654 = vmatpush1.msra.mxu0 0.0
  %1655 = vmatprep.subr.mxu0 0.0
  %1656 = vmatpush1.msra.mxu0 0.0
  %1657 = vmatprep.subr.mxu0 0.0
  %1658 = vmatpush1.msra.mxu0 0.0
  %1659 = vmatprep.subr.mxu0 0.0
  %1660 = vmatpush1.msra.mxu0 0.0
  %1661 = vmatprep.subr.mxu0 0.0
  %1662 = vmatpush1.msra.mxu0 0.0
  %1663 = vmatprep.subr.mxu0 0.0
  %1664 = vmatpush1.msra.mxu0 0.0
  %1665 = vmatprep.subr.mxu0 0.0
  %1666 = vmatpush1.msra.mxu0 0.0
  %1667 = vmatprep.subr.mxu0 0.0
  %1668 = vmatpush1.msra.mxu0 0.0
  %1669 = vmatprep.subr.mxu0 0.0
  %1670 = vmatpush1.msra.mxu0 0.0
  %1671 = vmatprep.subr.mxu0 0.0
  %1672 = vmatpush1.msra.mxu0 0.0
  %1673 = vmatprep.mubr.f32.mxu0 0.0
  %1674 = vmatmul.mubr.f32.gmra.mrb[0].mxu0 %v1583
  %v1675 = vpop.f32.mrb[0].mxu0
  %v1676 = vadd.f32 0.0, %v1675
  %v1677 = vpop.f32.mrb[0].mxu0
  %1678 = vdwg.mxu0
  %v1679 = vmul.f32 %v1676, 0.0078125
  %1680 = vmatprep.subr.mxu0 0.0
  %1681 = vmatpush1.msra.mxu0 %v1593
  %1682 = vmatprep.subr.mxu0 0.0
  %1683 = vmatpush1.msra.mxu0 %v1594
  %1684 = vmatprep.subr.mxu0 0.0
  %1685 = vmatpush1.msra.mxu0 %v1595
  %1686 = vmatprep.subr.mxu0 0.0
  %1687 = vmatpush1.msra.mxu0 %v1596
  %1688 = vmatprep.subr.mxu0 0.0
  %1689 = vmatpush1.msra.mxu0 %v1597
  %1690 = vmatprep.subr.mxu0 0.0
  %1691 = vmatpush1.msra.mxu0 %v1598
  %1692 = vmatprep.subr.mxu0 0.0
  %1693 = vmatpush1.msra.mxu0 %v1599
  %1694 = vmatprep.subr.mxu0 0.0
  %1695 = vmatpush1.msra.mxu0 %v1600
  %1696 = vmatprep.subr.mxu0 0.0
  %1697 = vmatpush1.msra.mxu0 %v1601
  %1698 = vmatprep.subr.mxu0 0.0
  %1699 = vmatpush1.msra.mxu0 %v1602
  %1700 = vmatprep.subr.mxu0 0.0
  %1701 = vmatpush1.msra.mxu0 %v1603
  %1702 = vmatprep.subr.mxu0 0.0
  %1703 = vmatpush1.msra.mxu0 %v1604
  %1704 = vmatprep.subr.mxu0 0.0
  %1705 = vmatpush1.msra.mxu0 %v1605
  %1706 = vmatprep.subr.mxu0 0.0
  %1707 = vmatpush1.msra.mxu0 %v1606
  %1708 = vmatprep.subr.mxu0 0.0
  %1709 = vmatpush1.msra.mxu0 %v1607
  %1710 = vmatprep.subr.mxu0 0.0
  %1711 = vmatpush1.msra.mxu0 %v1608
  %1712 = vmatprep.subr.mxu0 0.0
  %1713 = vmatpush1.msra.mxu0 0.0
  %1714 = vmatprep.subr.mxu0 0.0
  %1715 = vmatpush1.msra.mxu0 0.0
  %1716 = vmatprep.subr.mxu0 0.0
  %1717 = vmatpush1.msra.mxu0 0.0
  %1718 = vmatprep.subr.mxu0 0.0
  %1719 = vmatpush1.msra.mxu0 0.0
  %1720 = vmatprep.subr.mxu0 0.0
  %1721 = vmatpush1.msra.mxu0 0.0
  %1722 = vmatprep.subr.mxu0 0.0
  %1723 = vmatpush1.msra.mxu0 0.0
  %1724 = vmatprep.subr.mxu0 0.0
  %1725 = vmatpush1.msra.mxu0 0.0
  %1726 = vmatprep.subr.mxu0 0.0
  %1727 = vmatpush1.msra.mxu0 0.0
  %1728 = vmatprep.subr.mxu0 0.0
  %1729 = vmatpush1.msra.mxu0 0.0
  %1730 = vmatprep.subr.mxu0 0.0
  %1731 = vmatpush1.msra.mxu0 0.0
  %1732 = vmatprep.subr.mxu0 0.0
  %1733 = vmatpush1.msra.mxu0 0.0
  %1734 = vmatprep.subr.mxu0 0.0
  %1735 = vmatpush1.msra.mxu0 0.0
  %1736 = vmatprep.subr.mxu0 0.0
  %1737 = vmatpush1.msra.mxu0 0.0
  %1738 = vmatprep.subr.mxu0 0.0
  %1739 = vmatpush1.msra.mxu0 0.0
  %1740 = vmatprep.subr.mxu0 0.0
  %1741 = vmatpush1.msra.mxu0 0.0
  %1742 = vmatprep.subr.mxu0 0.0
  %1743 = vmatpush1.msra.mxu0 0.0
  %1744 = vmatprep.mubr.f32.mxu0 0.0
  %1745 = vmatmul.mubr.f32.gmra.mrb[0].mxu0 %v1592
  %v1746 = vpop.f32.mrb[0].mxu0
  %v1747 = vadd.f32 0.0, %v1746
  %v1748 = vpop.f32.mrb[0].mxu0
  %1749 = vdwg.mxu0
  %v1750 = vmul.f32 %v1747, 0.0078125
  %v1751 = vmul.f32 %v1679, %v1679
  %v1752 = vsub.f32 %v1750, %v1751
  %v1753 = vadd.f32 %v1752, 1e-05
  %v1754 = vrsqrt.pop %v1753
  %v1755 = vlaneseq
  %v1756 = vshrl.u32 %v1755, 7
  %v1757 = vsub.s32 0, %v1756
  %v1758 = vrot.slane %v1679, %v1757
  %v1759 = vsub.f32 %v1573, %v1758
  %v1760 = vsub.f32 %v1574, %v1758
  %v1761 = vmul.f32 %v1754, %v1575
  %v1762 = vlaneseq
  %v1763 = vshrl.u32 %v1762, 7
  %v1764 = vsub.s32 0, %v1763
  %v1765 = vrot.slane %v1761, %v1764
  %v1766 = vmul.f32 %v1759, %v1765
  %v1767 = vmul.f32 %v1760, %v1765
  %v1768 = vlaneseq
  %v1769 = vshrl.u32 %v1768, 7
  %v1770 = vsub.s32 0, %v1769
  %v1771 = vrot.slane %v1576, %v1770
  %v1772 = vadd.f32 %v1766, %v1771
  %v1773 = vadd.f32 %v1767, %v1771
  %vm1774 = vcmp.gt.f32.partialorder %v1772, 20.0
  %vm1775 = vcmp.gt.f32.partialorder %v1773, 20.0
  %v1776 = vmul.f32 %v1772, 1.442695
  %v1777 = vpow.pop %v1776
  %v1778 = vmul.f32 %v1773, 1.442695
  %v1779 = vpow.pop %v1778
  %v1780 = vadd.f32 %v1777, 1.0
  %v1781 = vadd.f32 %v1779, 1.0
  %v1782 = vlog2.pop %v1780
  %v1783 = vmul.f32 %v1782, 0.6931472
  %v1784 = vlog2.pop %v1781
  %v1785 = vmul.f32 %v1784, 0.6931472
  %v1786 = vsel %vm1774, %v1772, %v1783
  %v1787 = vsel %vm1775, %v1773, %v1785
  %1788 = vst [vmem:[%s13] sm:$0xff] %v1786
  %1789 = vst [vmem:[%s13 + $0x8] sm:$0xff] %v1787
  // Predicated region
  $region54: #{forward.1} parent=0 // pred_check
    _
  $region55: #{forward.1} parent=0 // pred_check_branch
    %1791 = sbr.rel (0) target = $region57
  $region56: #{forward.1} parent=0 // pred_region
    _
  $region57: #{forward.1} parent=0 // pred_fallthru
    _
  // Predicated region
  $region58: #{forward.1} parent=0 // pred_check
    _
  $region59: #{forward.1} parent=0 // pred_check_branch
    %1793 = sbr.rel (0) target = $region61
  $region60: #{forward.1} parent=0 // pred_region
    _
  $region61: #{forward.1} parent=0 // pred_fallthru
    _

</llo_original>
